<compile_context>
chip_gen: v7x
topology: tpu7x:2x2x1
jax: 0.10.0
libtpu: 0.0.40
codegen_flags: <defaults>
</compile_context>

<pallas_src>
import numpy as np
import jax
import jax.numpy as jnp
from jax.experimental import pallas as pl
from jax.experimental.pallas import tpu as pltpu


def _round_up(v, m):
    return ((v + m - 1) // m) * m


def _act(h, act):
    if act == "relu":
        return jnp.maximum(h, 0.0)
    elif act == "sigmoid":
        return 1.0 / (1.0 + jnp.exp(-h))
    else:
        raise ValueError(act)


# ----------------------------------------------------------------------------
# Row-tiled dense MLP kernel (bf16 inputs/weights, f32 accumulation)
# ----------------------------------------------------------------------------
def make_mlp_kernel(num_layers, act, logsoftmax, valid_out):
    def kernel(*refs):
        x_ref = refs[0]
        out_ref = refs[-1]
        h = x_ref[...]                                         # bf16 (TM, Cin)
        h32 = None
        for l in range(num_layers):
            w = refs[1 + 2 * l][...]                           # bf16
            b = refs[2 + 2 * l][...]                           # f32 (1, Cout)
            h32 = jnp.dot(h, w, preferred_element_type=jnp.float32) + b
            if l < num_layers - 1:
                h32 = _act(h32, act)
                h = h32.astype(jnp.bfloat16)
        if logsoftmax:
            if valid_out is not None:
                # output lanes were padded to 128: mask the padding before softmax
                col = jax.lax.broadcasted_iota(jnp.int32, h32.shape, 1)
                h32 = jnp.where(col < valid_out, h32, -jnp.inf)
            m = jnp.max(h32, axis=-1, keepdims=True)
            h32 = h32 - m
            h32 = h32 - jnp.log(jnp.sum(jnp.exp(h32), axis=-1, keepdims=True))
        out_ref[...] = h32

    return kernel


def mlp_pallas(x, layers, act="relu", logsoftmax=False):
    """layers: list of (W [Cin,Cout], b [Cout]) with BatchNorm already folded."""
    N, Cin = x.shape
    out_dim = layers[-1][0].shape[1]
    out_pad = _round_up(out_dim, 128)          # lane-dense output stores
    TM = min(512, _round_up(N, 16))            # 16-row multiple (bf16 sublane tile)
    Npad = _round_up(N, TM)

    xp = jnp.pad(x.astype(jnp.float32), ((0, Npad - N), (0, 0))).astype(jnp.bfloat16)

    args = [xp]
    in_specs = [pl.BlockSpec((TM, Cin), lambda i: (i, 0))]
    L = len(layers)
    for li, (W, b) in enumerate(layers):
        b2 = b.reshape(1, -1)
        if li == L - 1 and out_pad != out_dim:
            W = jnp.pad(W, ((0, 0), (0, out_pad - out_dim)))
            b2 = jnp.pad(b2, ((0, 0), (0, out_pad - out_dim)))
        args += [W.astype(jnp.bfloat16), b2.astype(jnp.float32)]
        # TODO(synk): single-buffer these constant weight blocks (pl.Buffered(1))
        # to free VMEM headroom on v7x; default double buffering kept for safety.
        in_specs += [
            pl.BlockSpec(tuple(W.shape), lambda i: (0, 0)),
            pl.BlockSpec(tuple(b2.shape), lambda i: (0, 0)),
        ]

    out = pl.pallas_call(
        make_mlp_kernel(L, act, logsoftmax, out_dim if out_pad != out_dim else None),
        grid=(Npad // TM,),
        in_specs=in_specs,
        out_specs=pl.BlockSpec((TM, out_pad), lambda i: (i, 0)),
        out_shape=jax.ShapeDtypeStruct((Npad, out_pad), jnp.float32),
        compiler_params=pltpu.CompilerParams(
            dimension_semantics=("parallel",),
            vmem_limit_bytes=48 * 1024 * 1024),
    )(*args)
    return out[:N, :out_dim]


# ----------------------------------------------------------------------------
# PointNetConv kernel: KB neighbor slots per step, row-tiled queries,
# running max in f32 VMEM scratch, single store on the last K step.
# The pos_i correction term is cached in a VMEM scratch at k == 0.
# ----------------------------------------------------------------------------
def make_pointconv_kernel(num_layers, KB, TQ):
    def kernel(*refs):
        feat_ref = refs[0]        # (KB, TQ, Cin) bf16 = gathered [x_j | pos_j]
        posq_ref = refs[1]        # (TQ, 3) f32     = pos_i
        wp_ref = refs[2]          # (3, H1) bf16    = pos rows of W1 (bf16-rounded)
        out_ref = refs[-3]
        acc_ref = refs[-2]
        c_ref = refs[-1]          # (TQ, H1) f32 cached correction pos_i @ W1_pos
        k = pl.program_id(1)

        @pl.when(k == 0)
        def _():
            # per-query-tile correction, computed once and reused for all K steps
            c_ref[...] = jnp.dot(posq_ref[...].astype(jnp.bfloat16), wp_ref[...],
                                 preferred_element_type=jnp.float32)

        # Flatten the KB neighbor slots into rows so the MXU sees (KB*TQ, Cin).
        h = jnp.concatenate([feat_ref[j] for j in range(KB)], axis=0)

        # layer 0:  [x_j, pos_j - pos_i] @ W1 == [x_j, pos_j] @ W1 - pos_i @ W1_pos
        w1 = refs[3][...]
        b1 = refs[4][...]
        h32 = jnp.dot(h, w1, preferred_element_type=jnp.float32) + b1
        h32 = h32 - jnp.concatenate([c_ref[...]] * KB, axis=0)
        if num_layers > 1:
            h32 = jnp.maximum(h32, 0.0)
        h = h32.astype(jnp.bfloat16)

        for l in range(1, num_layers):
            w = refs[3 + 2 * l][...]
            b = refs[4 + 2 * l][...]
            h32 = jnp.dot(h, w, preferred_element_type=jnp.float32) + b
            if l < num_layers - 1:
                h32 = jnp.maximum(h32, 0.0)
                h = h32.astype(jnp.bfloat16)

        # max over the KB neighbor slots handled this grid step
        m = h32[0:TQ]
        for j in range(1, KB):
            m = jnp.maximum(m, h32[j * TQ:(j + 1) * TQ])

        @pl.when(k == 0)
        def _():
            acc_ref[...] = m

        @pl.when(k > 0)
        def _():
            acc_ref[...] = jnp.maximum(acc_ref[...], m)

        @pl.when(k == pl.num_programs(1) - 1)
        def _():
            out_ref[...] = acc_ref[...]

    return kernel


def pointconv_pallas(x, pos, pos_q_np, nbr_np, layers):
    """PointNetConv: out[i] = max_{j in N(i)} MLP([x_j, pos_j - pos_i])."""
    N, F = x.shape
    Nq, K = nbr_np.shape
    Cin = F + 3
    H1 = layers[0][0].shape[1]
    Cout = layers[-1][0].shape[1]
    assert layers[0][0].shape[0] == Cin

    KB = 8                                          # neighbor slots per grid step
    TQ = min(256, _round_up(Nq, 16))                # query rows per grid step
    Nqpad = _round_up(Nq, TQ)
    Kpad = _round_up(K, KB)

    # Neighbor-table padding: extra K slots duplicate slot 0 (max-invariant);
    # padded query rows gather row 0 (their results are sliced off).
    nbr_pad = np.zeros((Nqpad, Kpad), dtype=np.int32)
    nbr_pad[:Nq, :K] = nbr_np
    nbr_pad[:Nq, K:] = nbr_np[:, :1]

    # Single XLA gather of the pre-concatenated [x | pos] source directly into the
    # (K, Nq, Cin) layout the kernel consumes: no per-edge concat, no transpose
    # pass over the K-replicated tensor.
    src = jnp.concatenate([x, pos], axis=1).astype(jnp.bfloat16)       # (N, Cin)
    gathered = src[jnp.asarray(nbr_pad.T)]                             # (Kpad, Nqpad, Cin)
    # TODO(synk): fully fuse this gather into the kernel (scalar-prefetched nbr
    # table + in-kernel DMA gather) to remove the remaining HBM round trip.

    pos_q = jnp.pad(jnp.asarray(pos_q_np, dtype=jnp.float32),
                    ((0, Nqpad - Nq), (0, 0)))                          # (Nqpad, 3)
    # bf16-rounded pos rows of W1 so the correction matches the main matmul rounding
    w1_pos = layers[0][0][F:, :].astype(jnp.bfloat16)                   # (3, H1)

    args = [gathered, pos_q, w1_pos]
    in_specs = [
        pl.BlockSpec((KB, TQ, Cin), lambda q, k: (k, q, 0)),
        pl.BlockSpec((TQ, 3), lambda q, k: (q, 0)),
        pl.BlockSpec(tuple(w1_pos.shape), lambda q, k: (0, 0)),
    ]
    for (W, b) in layers:
        b2 = b.reshape(1, -1)
        args += [W.astype(jnp.bfloat16), b2.astype(jnp.float32)]
        in_specs += [
            pl.BlockSpec(tuple(W.shape), lambda q, k: (0, 0)),
            pl.BlockSpec(tuple(b2.shape), lambda q, k: (0, 0)),
        ]

    out = pl.pallas_call(
        make_pointconv_kernel(len(layers), KB, TQ),
        grid=(Nqpad // TQ, Kpad // KB),                # K axis last / "arbitrary"
        in_specs=in_specs,
        out_specs=pl.BlockSpec((TQ, Cout), lambda q, k: (q, 0)),
        out_shape=jax.ShapeDtypeStruct((Nqpad, Cout), jnp.float32),
        scratch_shapes=[pltpu.VMEM((TQ, Cout), jnp.float32),
                        pltpu.VMEM((TQ, H1), jnp.float32)],
        compiler_params=pltpu.CompilerParams(
            dimension_semantics=("parallel", "arbitrary"),
            vmem_limit_bytes=48 * 1024 * 1024),
    )(*args)
    return out[:Nq]


# ----------------------------------------------------------------------------
# Host-side graph construction (dynamic shapes -> numpy glue)
# ----------------------------------------------------------------------------
def fps_np(pos, batch, ratio):
    idx_all = []
    for b in np.unique(batch):
        ids = np.where(batch == b)[0]
        p = pos[ids]
        n = len(ids)
        m = int(np.ceil(ratio * n))
        sel = [0]  # deterministic start (PyG uses random_start=True)
        d = np.sum((p - p[0]) ** 2, axis=1)
        for _ in range(1, m):
            nxt = int(np.argmax(d))
            sel.append(nxt)
            d = np.minimum(d, np.sum((p - p[nxt]) ** 2, axis=1))
        idx_all.append(ids[np.asarray(sel)])
    return np.concatenate(idx_all).astype(np.int32)


def radius_dense_np(pos_src, pos_q, q_global_idx, r, batch_src, batch_q, max_nb=64):
    Nq = pos_q.shape[0]
    lists, maxk = [], 1
    for i in range(Nq):
        d2 = np.sum((pos_src - pos_q[i]) ** 2, axis=1)
        cand = np.where((d2 <= r * r) & (batch_src == batch_q[i]))[0]
        cand = cand[:max_nb]
        if len(cand) == 0:
            cand = np.asarray([q_global_idx[i]])
        lists.append(cand)
        maxk = max(maxk, len(cand))
    nbr = np.zeros((Nq, maxk), dtype=np.int32)
    for i, c in enumerate(lists):
        nbr[i, : len(c)] = c
        nbr[i, len(c):] = c[0]  # duplicate-fill: max() is unaffected
    return nbr


def knn_np(pos_x, batch_x, pos_y, batch_y, k):
    Ny = pos_y.shape[0]
    nbr = np.zeros((Ny, k), dtype=np.int32)
    for i in range(Ny):
        d2 = np.sum((pos_x - pos_y[i]) ** 2, axis=1)
        d2 = np.where(batch_x == batch_y[i], d2, np.inf)
        order = np.argsort(d2, kind="stable")[:k]
        valid = np.isfinite(d2[order])
        order = np.where(valid, order, order[0])
        nbr[i] = order
    return nbr


# ----------------------------------------------------------------------------
# Modules (each stage passes (x_jnp, pos_jnp, batch_np, pos_np))
# ----------------------------------------------------------------------------
def sa_module(layers, ratio, r, x, pos, batch_np, pos_np):
    idx = fps_np(pos_np, batch_np, ratio)
    pos_q_np = pos_np[idx]
    batch_q_np = batch_np[idx]
    nbr = radius_dense_np(pos_np, pos_q_np, idx, r, batch_np, batch_q_np, 64)
    out = pointconv_pallas(x, pos, pos_q_np, nbr, layers)
    return out, jnp.asarray(pos_q_np), batch_q_np, pos_q_np


def global_sa_module(layers, x, pos, batch_np, pos_np):
    h = jnp.concatenate([x, pos], axis=1)
    h = mlp_pallas(h, layers, act="relu")
    num_graphs = int(batch_np.max()) + 1
    pooled = jax.ops.segment_max(h, jnp.asarray(batch_np, dtype=jnp.int32),
                                 num_segments=num_graphs)
    pos_out_np = np.zeros((num_graphs, 3), dtype=np.float32)
    batch_out_np = np.arange(num_graphs, dtype=np.int32)
    return pooled, jnp.asarray(pos_out_np), batch_out_np, pos_out_np


def fp_module(layers, k, src, skip):
    x, _, batch_np, pos_np = src
    x_skip, pos_skip, batch_skip_np, pos_skip_np = skip

    nbr = jnp.asarray(knn_np(pos_np, batch_np, pos_skip_np, batch_skip_np, k))
    pos_x = jnp.asarray(pos_np)
    pos_y = jnp.asarray(pos_skip_np)
    diff = pos_x[nbr] - pos_y[:, None, :]
    d2 = jnp.sum(diff * diff, axis=-1, keepdims=True)
    w = 1.0 / jnp.maximum(d2, 1e-16)
    xi = jnp.sum(x[nbr] * w, axis=1) / jnp.sum(w, axis=1)  # knn_interpolate

    if x_skip is not None:
        xi = jnp.concatenate([xi, x_skip], axis=1)
    out = mlp_pallas(xi, layers, act="relu")
    return out, pos_skip, batch_skip_np, pos_skip_np


# ----------------------------------------------------------------------------
# Parameters (deterministic init, BatchNorm folded into the linear layers)
# ----------------------------------------------------------------------------
def init_mlp_params(key, widths, norm=True):
    eps = 1e-5
    layers = []
    keys = jax.random.split(key, len(widths) - 1)
    for l in range(len(widths) - 1):
        fan_in, fan_out = widths[l], widths[l + 1]
        kw, kb = jax.random.split(keys[l])
        bound = 1.0 / np.sqrt(fan_in)
        W = jax.random.uniform(kw, (fan_in, fan_out), jnp.float32, -bound, bound)
        b = jax.random.uniform(kb, (fan_out,), jnp.float32, -bound, bound)
        if norm and l < len(widths) - 2:
            # eval-mode BatchNorm1d defaults: gamma=1, beta=0, mean=0, var=1
            scale = 1.0 / np.sqrt(1.0 + eps)
            W = W * scale
            b = b * scale
        layers.append((W, b))
    return layers


def init_pointnet_params(key, num_classes, num_features):
    ks = jax.random.split(key, 9)
    return {
        "sa1": init_mlp_params(ks[0], [3 + num_features, 64, 64, 128]),
        "sa2": init_mlp_params(ks[1], [128 + 3, 128, 128, 256]),
        "sa3": init_mlp_params(ks[2], [256 + 3, 256, 256, 512]),
        "sa4": init_mlp_params(ks[3], [512 + 3, 512, 512, 1024]),
        "fp4": init_mlp_params(ks[4], [1024 + 512, 512, 512]),
        "fp3": init_mlp_params(ks[5], [512 + 256, 256, 256]),
        "fp2": init_mlp_params(ks[6], [256 + 128, 256, 256]),
        "fp1": init_mlp_params(ks[7], [256 + num_features, 128, 128, 128]),
        "cls": init_mlp_params(ks[8], [128, 128, 128, num_classes], norm=False),
    }


def pointnet_forward(params, x, pos, batch_np):
    pos_np = np.asarray(jax.device_get(pos))
    sa0 = (x, pos, batch_np, pos_np)
    sa1 = sa_module(params["sa1"], 0.5, 0.2, *sa0)
    sa2 = sa_module(params["sa2"], 0.5, 0.2, *sa1)
    sa3 = sa_module(params["sa3"], 0.5, 0.2, *sa2)
    sa4 = global_sa_module(params["sa4"], *sa3)
    fp4 = fp_module(params["fp4"], 1, sa4, sa3)
    fp3 = fp_module(params["fp3"], 3, fp4, sa2)
    fp2 = fp_module(params["fp2"], 3, fp3, sa1)
    fp1 = fp_module(params["fp1"], 3, fp2, sa0)
    # final classifier MLP (sigmoid act, no norm) + log_softmax, fused in-kernel
    return mlp_pallas(fp1[0], params["cls"], act="sigmoid", logsoftmax=True)


# ----------------------------------------------------------------------------
if __name__ == "__main__":
    num_features = 3
    num_classes = 4
    num_graphs = 2
    n_per_graph = 32
    N = num_graphs * n_per_graph

    key = jax.random.PRNGKey(0)
    k_pos, k_x, k_params = jax.random.split(key, 3)
    pos = jax.random.uniform(k_pos, (N, 3), jnp.float32)          # unit cube
    x = jax.random.normal(k_x, (N, num_features), jnp.float32)    # node features
    batch_np = np.repeat(np.arange(num_graphs), n_per_graph).astype(np.int32)

    params = init_pointnet_params(k_params, num_classes, num_features)

    out = pointnet_forward(params, x, pos, batch_np)
    out = jax.block_until_ready(out)

    assert out.shape == (N, num_classes), out.shape
    assert bool(jnp.all(jnp.isfinite(out)))
    # rows of log_softmax must sum to ~1 in prob space
    assert bool(jnp.allclose(jnp.sum(jnp.exp(out), axis=-1), 1.0, atol=1e-4))
    print("KERNEL_OK")
</pallas_src>

<mosaic_0001>
module attributes {stable_mosaic.version = 11 : i64} {
  func.func @kernel(%arg0: i32, %arg1: i32, %arg2: memref<8x32x6xbf16, #tpu.memory_space<vmem>>, %arg3: memref<32x3xf32, #tpu.memory_space<vmem>>, %arg4: memref<3x64xbf16, #tpu.memory_space<vmem>>, %arg5: memref<6x64xbf16, #tpu.memory_space<vmem>>, %arg6: memref<1x64xf32, #tpu.memory_space<vmem>>, %arg7: memref<64x64xbf16, #tpu.memory_space<vmem>>, %arg8: memref<1x64xf32, #tpu.memory_space<vmem>>, %arg9: memref<64x128xbf16, #tpu.memory_space<vmem>>, %arg10: memref<1x128xf32, #tpu.memory_space<vmem>>, %arg11: memref<32x128xf32, #tpu.memory_space<vmem>>, %arg12: memref<32x128xf32, #tpu.memory_space<vmem>>, %arg13: memref<32x64xf32, #tpu.memory_space<vmem>>) attributes {dimension_semantics = [#tpu.dimension_semantics<parallel>, #tpu.dimension_semantics<arbitrary>], iteration_bounds = array<i64: 1, 1>, scalar_prefetch = 0 : i64, scratch_operands = 2 : i64, tpu.core_type = #tpu.core_type<tc>, window_params = [{transform_indices = @transform_0, window_bounds = array<i64: 8, 32, 6>}, {transform_indices = @transform_1, window_bounds = array<i64: 32, 3>}, {pipeline_mode = #tpu.pipeline_mode<synchronous>, transform_indices = @transform_2, window_bounds = array<i64: 3, 64>}, {pipeline_mode = #tpu.pipeline_mode<synchronous>, transform_indices = @transform_3, window_bounds = array<i64: 6, 64>}, {pipeline_mode = #tpu.pipeline_mode<synchronous>, transform_indices = @transform_4, window_bounds = array<i64: 1, 64>}, {pipeline_mode = #tpu.pipeline_mode<synchronous>, transform_indices = @transform_5, window_bounds = array<i64: 64, 64>}, {pipeline_mode = #tpu.pipeline_mode<synchronous>, transform_indices = @transform_6, window_bounds = array<i64: 1, 64>}, {pipeline_mode = #tpu.pipeline_mode<synchronous>, transform_indices = @transform_7, window_bounds = array<i64: 64, 128>}, {pipeline_mode = #tpu.pipeline_mode<synchronous>, transform_indices = @transform_8, window_bounds = array<i64: 1, 128>}, {transform_indices = @transform_9, window_bounds = array<i64: 32, 128>}]} {
    %c0_i32 = arith.constant 0 : i32
    %0 = arith.cmpi eq, %arg1, %c0_i32 : i32
    %1 = arith.extui %0 : i1 to i32
    %c0_i32_0 = arith.constant 0 : i32
    %2 = arith.cmpi ne, %1, %c0_i32_0 : i32
    scf.if %2 {
      %c0_41 = arith.constant 0 : index
      %c0_42 = arith.constant 0 : index
      %68 = vector.load %arg3[%c0_41, %c0_42] : memref<32x3xf32, #tpu.memory_space<vmem>>, vector<32x3xf32>
      %69 = arith.truncf %68 : vector<32x3xf32> to vector<32x3xbf16>
      %c0_43 = arith.constant 0 : index
      %c0_44 = arith.constant 0 : index
      %70 = vector.load %arg4[%c0_43, %c0_44] : memref<3x64xbf16, #tpu.memory_space<vmem>>, vector<3x64xbf16>
      %cst_45 = arith.constant dense<0.000000e+00> : vector<32x64xf32>
      %71 = tpu.matmul %69, %70, %cst_45 {dimension_numbers = #tpu.dot_dimension_numbers<[1], [0], [0], [1], [0, 0, 1, 1], [], []>} : vector<32x3xbf16>, vector<3x64xbf16>, vector<32x64xf32> -> vector<32x64xf32>
      %c0_46 = arith.constant 0 : index
      %c0_47 = arith.constant 0 : index
      %72 = vector.load %arg13[%c0_46, %c0_47] : memref<32x64xf32, #tpu.memory_space<vmem>>, vector<32x64xf32>
      tpu.vector_store %arg13[%c0_46, %c0_47], %71 {strides = array<i32>} : memref<32x64xf32, #tpu.memory_space<vmem>>, vector<32x64xf32>,
    } else {
    }
    %c0 = arith.constant 0 : index
    %c0_1 = arith.constant 0 : index
    %c0_2 = arith.constant 0 : index
    %3 = vector.load %arg2[%c0, %c0_1, %c0_2] : memref<8x32x6xbf16, #tpu.memory_space<vmem>>, vector<1x32x6xbf16>
    %4 = vector.shape_cast %3 : vector<1x32x6xbf16> to vector<32x6xbf16>
    %c1 = arith.constant 1 : index
    %c0_3 = arith.constant 0 : index
    %c0_4 = arith.constant 0 : index
    %5 = vector.load %arg2[%c1, %c0_3, %c0_4] : memref<8x32x6xbf16, #tpu.memory_space<vmem>>, vector<1x32x6xbf16>
    %6 = vector.shape_cast %5 : vector<1x32x6xbf16> to vector<32x6xbf16>
    %c2 = arith.constant 2 : index
    %c0_5 = arith.constant 0 : index
    %c0_6 = arith.constant 0 : index
    %7 = vector.load %arg2[%c2, %c0_5, %c0_6] : memref<8x32x6xbf16, #tpu.memory_space<vmem>>, vector<1x32x6xbf16>
    %8 = vector.shape_cast %7 : vector<1x32x6xbf16> to vector<32x6xbf16>
    %c3 = arith.constant 3 : index
    %c0_7 = arith.constant 0 : index
    %c0_8 = arith.constant 0 : index
    %9 = vector.load %arg2[%c3, %c0_7, %c0_8] : memref<8x32x6xbf16, #tpu.memory_space<vmem>>, vector<1x32x6xbf16>
    %10 = vector.shape_cast %9 : vector<1x32x6xbf16> to vector<32x6xbf16>
    %c4 = arith.constant 4 : index
    %c0_9 = arith.constant 0 : index
    %c0_10 = arith.constant 0 : index
    %11 = vector.load %arg2[%c4, %c0_9, %c0_10] : memref<8x32x6xbf16, #tpu.memory_space<vmem>>, vector<1x32x6xbf16>
    %12 = vector.shape_cast %11 : vector<1x32x6xbf16> to vector<32x6xbf16>
    %c5 = arith.constant 5 : index
    %c0_11 = arith.constant 0 : index
    %c0_12 = arith.constant 0 : index
    %13 = vector.load %arg2[%c5, %c0_11, %c0_12] : memref<8x32x6xbf16, #tpu.memory_space<vmem>>, vector<1x32x6xbf16>
    %14 = vector.shape_cast %13 : vector<1x32x6xbf16> to vector<32x6xbf16>
    %c6 = arith.constant 6 : index
    %c0_13 = arith.constant 0 : index
    %c0_14 = arith.constant 0 : index
    %15 = vector.load %arg2[%c6, %c0_13, %c0_14] : memref<8x32x6xbf16, #tpu.memory_space<vmem>>, vector<1x32x6xbf16>
    %16 = vector.shape_cast %15 : vector<1x32x6xbf16> to vector<32x6xbf16>
    %c7 = arith.constant 7 : index
    %c0_15 = arith.constant 0 : index
    %c0_16 = arith.constant 0 : index
    %17 = vector.load %arg2[%c7, %c0_15, %c0_16] : memref<8x32x6xbf16, #tpu.memory_space<vmem>>, vector<1x32x6xbf16>
    %18 = vector.shape_cast %17 : vector<1x32x6xbf16> to vector<32x6xbf16>
    %19 = tpu.concatenate %4, %6, %8, %10, %12, %14, %16, %18 in 0 : vector<32x6xbf16>, vector<32x6xbf16>, vector<32x6xbf16>, vector<32x6xbf16>, vector<32x6xbf16>, vector<32x6xbf16>, vector<32x6xbf16>, vector<32x6xbf16> -> vector<256x6xbf16>
    %c0_17 = arith.constant 0 : index
    %c0_18 = arith.constant 0 : index
    %20 = vector.load %arg5[%c0_17, %c0_18] : memref<6x64xbf16, #tpu.memory_space<vmem>>, vector<6x64xbf16>
    %c0_19 = arith.constant 0 : index
    %c0_20 = arith.constant 0 : index
    %21 = vector.load %arg6[%c0_19, %c0_20] : memref<1x64xf32, #tpu.memory_space<vmem>>, vector<1x64xf32>
    %cst = arith.constant dense<0.000000e+00> : vector<256x64xf32>
    %22 = tpu.matmul %19, %20, %cst {dimension_numbers = #tpu.dot_dimension_numbers<[1], [0], [0], [1], [0, 0, 1, 1], [], []>} : vector<256x6xbf16>, vector<6x64xbf16>, vector<256x64xf32> -> vector<256x64xf32>
    %23 = vector.broadcast %21 : vector<1x64xf32> to vector<256x64xf32>
    %24 = arith.addf %22, %23 : vector<256x64xf32>
    %c0_21 = arith.constant 0 : index
    %c0_22 = arith.constant 0 : index
    %25 = vector.load %arg13[%c0_21, %c0_22] : memref<32x64xf32, #tpu.memory_space<vmem>>, vector<32x64xf32>
    %26 = tpu.concatenate %25, %25, %25, %25, %25, %25, %25, %25 in 0 : vector<32x64xf32>, vector<32x64xf32>, vector<32x64xf32>, vector<32x64xf32>, vector<32x64xf32>, vector<32x64xf32>, vector<32x64xf32>, vector<32x64xf32> -> vector<256x64xf32>
    %27 = arith.subf %24, %26 : vector<256x64xf32>
    %cst_23 = arith.constant 0.000000e+00 : f32
    %28 = vector.broadcast %cst_23 : f32 to vector<256x64xf32>
    %29 = arith.maximumf %27, %28 : vector<256x64xf32>
    %30 = arith.truncf %29 : vector<256x64xf32> to vector<256x64xbf16>
    %c0_24 = arith.constant 0 : index
    %c0_25 = arith.constant 0 : index
    %31 = vector.load %arg7[%c0_24, %c0_25] : memref<64x64xbf16, #tpu.memory_space<vmem>>, vector<64x64xbf16>
    %c0_26 = arith.constant 0 : index
    %c0_27 = arith.constant 0 : index
    %32 = vector.load %arg8[%c0_26, %c0_27] : memref<1x64xf32, #tpu.memory_space<vmem>>, vector<1x64xf32>
    %cst_28 = arith.constant dense<0.000000e+00> : vector<256x64xf32>
    %33 = tpu.matmul %30, %31, %cst_28 {dimension_numbers = #tpu.dot_dimension_numbers<[1], [0], [0], [1], [0, 0, 1, 1], [], []>} : vector<256x64xbf16>, vector<64x64xbf16>, vector<256x64xf32> -> vector<256x64xf32>
    %34 = vector.broadcast %32 : vector<1x64xf32> to vector<256x64xf32>
    %35 = arith.addf %33, %34 : vector<256x64xf32>
    %cst_29 = arith.constant 0.000000e+00 : f32
    %36 = vector.broadcast %cst_29 : f32 to vector<256x64xf32>
    %37 = arith.maximumf %35, %36 : vector<256x64xf32>
    %38 = arith.truncf %37 : vector<256x64xf32> to vector<256x64xbf16>
    %c0_30 = arith.constant 0 : index
    %c0_31 = arith.constant 0 : index
    %39 = vector.load %arg9[%c0_30, %c0_31] : memref<64x128xbf16, #tpu.memory_space<vmem>>, vector<64x128xbf16>
    %c0_32 = arith.constant 0 : index
    %c0_33 = arith.constant 0 : index
    %40 = vector.load %arg10[%c0_32, %c0_33] : memref<1x128xf32, #tpu.memory_space<vmem>>, vector<1x128xf32>
    %cst_34 = arith.constant dense<0.000000e+00> : vector<256x128xf32>
    %41 = tpu.matmul %38, %39, %cst_34 {dimension_numbers = #tpu.dot_dimension_numbers<[1], [0], [0], [1], [0, 0, 1, 1], [], []>} : vector<256x64xbf16>, vector<64x128xbf16>, vector<256x128xf32> -> vector<256x128xf32>
    %42 = vector.broadcast %40 : vector<1x128xf32> to vector<256x128xf32>
    %43 = arith.addf %41, %42 : vector<256x128xf32>
    %44 = vector.extract_strided_slice %43 {offsets = [0, 0], sizes = [32, 128], strides = [1, 1]} : vector<256x128xf32> to vector<32x128xf32>
    %45 = vector.extract_strided_slice %43 {offsets = [32, 0], sizes = [32, 128], strides = [1, 1]} : vector<256x128xf32> to vector<32x128xf32>
    %46 = arith.maximumf %44, %45 : vector<32x128xf32>
    %47 = vector.extract_strided_slice %43 {offsets = [64, 0], sizes = [32, 128], strides = [1, 1]} : vector<256x128xf32> to vector<32x128xf32>
    %48 = arith.maximumf %46, %47 : vector<32x128xf32>
    %49 = vector.extract_strided_slice %43 {offsets = [96, 0], sizes = [32, 128], strides = [1, 1]} : vector<256x128xf32> to vector<32x128xf32>
    %50 = arith.maximumf %48, %49 : vector<32x128xf32>
    %51 = vector.extract_strided_slice %43 {offsets = [128, 0], sizes = [32, 128], strides = [1, 1]} : vector<256x128xf32> to vector<32x128xf32>
    %52 = arith.maximumf %50, %51 : vector<32x128xf32>
    %53 = vector.extract_strided_slice %43 {offsets = [160, 0], sizes = [32, 128], strides = [1, 1]} : vector<256x128xf32> to vector<32x128xf32>
    %54 = arith.maximumf %52, %53 : vector<32x128xf32>
    %55 = vector.extract_strided_slice %43 {offsets = [192, 0], sizes = [32, 128], strides = [1, 1]} : vector<256x128xf32> to vector<32x128xf32>
    %56 = arith.maximumf %54, %55 : vector<32x128xf32>
    %57 = vector.extract_strided_slice %43 {offsets = [224, 0], sizes = [32, 128], strides = [1, 1]} : vector<256x128xf32> to vector<32x128xf32>
    %58 = arith.maximumf %56, %57 : vector<32x128xf32>
    %c0_i32_35 = arith.constant 0 : i32
    %59 = arith.cmpi eq, %arg1, %c0_i32_35 : i32
    %60 = arith.extui %59 : i1 to i32
    %c0_i32_36 = arith.constant 0 : i32
    %61 = arith.cmpi ne, %60, %c0_i32_36 : i32
    scf.if %61 {
      %c0_41 = arith.constant 0 : index
      %c0_42 = arith.constant 0 : index
      %68 = vector.load %arg12[%c0_41, %c0_42] : memref<32x128xf32, #tpu.memory_space<vmem>>, vector<32x128xf32>
      tpu.vector_store %arg12[%c0_41, %c0_42], %58 {strides = array<i32>} : memref<32x128xf32, #tpu.memory_space<vmem>>, vector<32x128xf32>,
    } else {
    }
    %c0_i32_37 = arith.constant 0 : i32
    %62 = arith.cmpi sgt, %arg1, %c0_i32_37 : i32
    %63 = arith.extui %62 : i1 to i32
    %c0_i32_38 = arith.constant 0 : i32
    %64 = arith.cmpi ne, %63, %c0_i32_38 : i32
    scf.if %64 {
      %c0_41 = arith.constant 0 : index
      %c0_42 = arith.constant 0 : index
      %68 = vector.load %arg12[%c0_41, %c0_42] : memref<32x128xf32, #tpu.memory_space<vmem>>, vector<32x128xf32>
      %69 = arith.maximumf %68, %58 : vector<32x128xf32>
      %c0_43 = arith.constant 0 : index
      %c0_44 = arith.constant 0 : index
      %70 = vector.load %arg12[%c0_43, %c0_44] : memref<32x128xf32, #tpu.memory_space<vmem>>, vector<32x128xf32>
      tpu.vector_store %arg12[%c0_43, %c0_44], %69 {strides = array<i32>} : memref<32x128xf32, #tpu.memory_space<vmem>>, vector<32x128xf32>,
    } else {
    }
    %c0_i32_39 = arith.constant 0 : i32
    %65 = arith.cmpi eq, %arg1, %c0_i32_39 : i32
    %66 = arith.extui %65 : i1 to i32
    %c0_i32_40 = arith.constant 0 : i32
    %67 = arith.cmpi ne, %66, %c0_i32_40 : i32
    scf.if %67 {
      %c0_41 = arith.constant 0 : index
      %c0_42 = arith.constant 0 : index
      %68 = vector.load %arg12[%c0_41, %c0_42] : memref<32x128xf32, #tpu.memory_space<vmem>>, vector<32x128xf32>
      %c0_43 = arith.constant 0 : index
      %c0_44 = arith.constant 0 : index
      %69 = vector.load %arg11[%c0_43, %c0_44] : memref<32x128xf32, #tpu.memory_space<vmem>>, vector<32x128xf32>
      tpu.vector_store %arg11[%c0_43, %c0_44], %68 {strides = array<i32>} : memref<32x128xf32, #tpu.memory_space<vmem>>, vector<32x128xf32>,
    } else {
    }
    return
  }
  func.func @transform_0(%arg0: i32, %arg1: i32) -> (i32, i32, i32) {
    %c0_i32 = arith.constant 0 : i32
    %c0_i32_0 = arith.constant 0 : i32
    return %arg1, %arg0, %c0_i32 : i32, i32, i32
  }
  func.func @transform_1(%arg0: i32, %arg1: i32) -> (i32, i32) {
    %c0_i32 = arith.constant 0 : i32
    %c0_i32_0 = arith.constant 0 : i32
    return %arg0, %c0_i32 : i32, i32
  }
  func.func @transform_2(%arg0: i32, %arg1: i32) -> (i32, i32) {
    %c0_i32 = arith.constant 0 : i32
    %c0_i32_0 = arith.constant 0 : i32
    %c0_i32_1 = arith.constant 0 : i32
    return %c0_i32, %c0_i32_0 : i32, i32
  }
  func.func @transform_3(%arg0: i32, %arg1: i32) -> (i32, i32) {
    %c0_i32 = arith.constant 0 : i32
    %c0_i32_0 = arith.constant 0 : i32
    %c0_i32_1 = arith.constant 0 : i32
    return %c0_i32, %c0_i32_0 : i32, i32
  }
  func.func @transform_4(%arg0: i32, %arg1: i32) -> (i32, i32) {
    %c0_i32 = arith.constant 0 : i32
    %c0_i32_0 = arith.constant 0 : i32
    %c0_i32_1 = arith.constant 0 : i32
    return %c0_i32, %c0_i32_0 : i32, i32
  }
  func.func @transform_5(%arg0: i32, %arg1: i32) -> (i32, i32) {
    %c0_i32 = arith.constant 0 : i32
    %c0_i32_0 = arith.constant 0 : i32
    %c0_i32_1 = arith.constant 0 : i32
    return %c0_i32, %c0_i32_0 : i32, i32
  }
  func.func @transform_6(%arg0: i32, %arg1: i32) -> (i32, i32) {
    %c0_i32 = arith.constant 0 : i32
    %c0_i32_0 = arith.constant 0 : i32
    %c0_i32_1 = arith.constant 0 : i32
    return %c0_i32, %c0_i32_0 : i32, i32
  }
  func.func @transform_7(%arg0: i32, %arg1: i32) -> (i32, i32) {
    %c0_i32 = arith.constant 0 : i32
    %c0_i32_0 = arith.constant 0 : i32
    %c0_i32_1 = arith.constant 0 : i32
    return %c0_i32, %c0_i32_0 : i32, i32
  }
  func.func @transform_8(%arg0: i32, %arg1: i32) -> (i32, i32) {
    %c0_i32 = arith.constant 0 : i32
    %c0_i32_0 = arith.constant 0 : i32
    %c0_i32_1 = arith.constant 0 : i32
    return %c0_i32, %c0_i32_0 : i32, i32
  }
  func.func @transform_9(%arg0: i32, %arg1: i32) -> (i32, i32) {
    %c0_i32 = arith.constant 0 : i32
    %c0_i32_0 = arith.constant 0 : i32
    return %arg0, %c0_i32 : i32, i32
  }
}

</mosaic_0001>

<llo_original>
// kernel: tpu_custom_call.1
$region0: #{tpu_custom_call.1}
  #allocation0 [shape = 'u32[]', space=smem, size = 0x4, offset = 0x4, fixed_abs, tag = 'smem constant byte address 0x4 - core index']
  #allocation1 [shape = 'u32[144,128]{1,0:T(1,128)}', space=vmem, size = 0x12000, scoped, tag = 'internal scratch']
  #allocation2 [shape = 'f32[32,128]{1,0:T(8,128)}', space=vmem, size = 0x4000, scoped, tag = 'scratch operand']
  #allocation3 [shape = 'f32[32,64]{1,0:T(8,128)}', space=vmem, size = 0x4000, scoped, tag = 'scratch operand']
  %s0 = inlined_call_operand.vmem [shape: bf16[8,32,6], index: 0, kind: input, shape index: {}]
  %s1 = inlined_call_operand.vmem [shape: f32[32,3], index: 1, kind: input, shape index: {}]
  %s2 = inlined_call_operand.vmem [shape: bf16[3,64], index: 2, kind: input, shape index: {}]
  %s3 = inlined_call_operand.vmem [shape: bf16[6,64], index: 3, kind: input, shape index: {}]
  %s4 = inlined_call_operand.vmem [shape: f32[1,64], index: 4, kind: input, shape index: {}]
  %s5 = inlined_call_operand.vmem [shape: bf16[64,64], index: 5, kind: input, shape index: {}]
  %s6 = inlined_call_operand.vmem [shape: f32[1,64], index: 6, kind: input, shape index: {}]
  %s7 = inlined_call_operand.vmem [shape: bf16[64,128], index: 7, kind: input, shape index: {}]
  %s8 = inlined_call_operand.vmem [shape: f32[1,128], index: 8, kind: input, shape index: {}]
  %s9 = inlined_call_operand.hbm [shape: f32[32,128], index: 9, kind: output, shape index: {}]
  %s10 = sld [smem:[#allocation0]]
  $region62: #{tpu_custom_call.1} parent=0
    _
  %s12 = ssub.s32 1, %s10
  %s13 = scalar_select 0, %s12, %s10
  $region1: #{tpu_custom_call.1} parent=0
    #allocation4 [shape = 'u8[16384]{0}', space=vmem, size = 0x4000, scoped, tag = 'output window, operand 0, single buffered']
    #allocation5 [shape = 's32[1]{0}', space=sflag, size = 0x4, scoped, tag = 'scoped memory for tpu_custom_call.1']
    %14 = vsyncpa [#allocation5], 0
    // Predicated region
    $region2: #{tpu_custom_call.1} parent=1 // pred_check
      _
    $region3: #{tpu_custom_call.1} parent=1 // pred_check_branch
      %16 = sbr.rel (0) target = $region5
    $region4: #{tpu_custom_call.1} parent=1 // pred_region
      _
    $region5: #{tpu_custom_call.1} parent=1 // pred_fallthru
      _
    // Predicated region
    $region6: #{tpu_custom_call.1} parent=1 // pred_check
      _
    $region7: #{tpu_custom_call.1} parent=1 // pred_check_branch
      %18 = sbr.rel (0) target = $region9
    $region8: #{tpu_custom_call.1} parent=1 // pred_region
      _
    $region9: #{tpu_custom_call.1} parent=1 // pred_fallthru
      _
    // Predicated region
    $region10: #{tpu_custom_call.1} parent=1 // pred_check
      _
    $region11: #{tpu_custom_call.1} parent=1 // pred_check_branch
      %20 = sbr.rel (0) target = $region13
    $region12: #{tpu_custom_call.1} parent=1 // pred_region
      _
    $region13: #{tpu_custom_call.1} parent=1 // pred_fallthru
      _
    // Predicated region
    $region14: #{tpu_custom_call.1} parent=1 // pred_check
      _
    $region15: #{tpu_custom_call.1} parent=1 // pred_check_branch
      %22 = sbr.rel (0) target = $region17
    $region16: #{tpu_custom_call.1} parent=1 // pred_region
      _
    $region17: #{tpu_custom_call.1} parent=1 // pred_fallthru
      _
    // Predicated region
    $region18: #{tpu_custom_call.1} parent=1 // pred_check
      _
    $region19: #{tpu_custom_call.1} parent=1 // pred_check_branch
      %24 = sbr.rel (0) target = $region21
    $region20: #{tpu_custom_call.1} parent=1 // pred_region
      _
    $region21: #{tpu_custom_call.1} parent=1 // pred_fallthru
      _
    // Predicated region
    $region22: #{tpu_custom_call.1} parent=1 // pred_check
      _
    $region23: #{tpu_custom_call.1} parent=1 // pred_check_branch
      %26 = sbr.rel (0) target = $region25
    $region24: #{tpu_custom_call.1} parent=1 // pred_region
      _
    $region25: #{tpu_custom_call.1} parent=1 // pred_fallthru
      _
    // Predicated region
    $region26: #{tpu_custom_call.1} parent=1 // pred_check
      _
    $region27: #{tpu_custom_call.1} parent=1 // pred_check_branch
      %28 = sbr.rel (0) target = $region29
    $region28: #{tpu_custom_call.1} parent=1 // pred_region
      _
    $region29: #{tpu_custom_call.1} parent=1 // pred_fallthru
      _
    // Predicated region
    $region30: #{tpu_custom_call.1} parent=1 // pred_check
      _
    $region31: #{tpu_custom_call.1} parent=1 // pred_check_branch
      %30 = sbr.rel (0) target = $region33
    $region32: #{tpu_custom_call.1} parent=1 // pred_region
      _
    $region33: #{tpu_custom_call.1} parent=1 // pred_fallthru
      _
    // Predicated region
    $region34: #{tpu_custom_call.1} parent=1 // pred_check
      _
    $region35: #{tpu_custom_call.1} parent=1 // pred_check_branch
      %32 = sbr.rel (0) target = $region37
    $region36: #{tpu_custom_call.1} parent=1 // pred_region
      _
    $region37: #{tpu_custom_call.1} parent=1 // pred_fallthru
      _
    %p34 = scmp.eq.s32.totalorder 0, 0
    // Predicated region
    $region38: #{tpu_custom_call.1} parent=1 // pred_check
      %p35 = pneg %p34
    $region39: #{tpu_custom_call.1} parent=1 // pred_check_branch
      %37 = sbr.rel (%p35) target = $region41
    $region40: #{tpu_custom_call.1} parent=1 // pred_region
      %v38 = vld [vmem:[%s1] sm:$0xff]
      %v39 = vld [vmem:[%s1 + $0x8] sm:$0xff]
      %v40 = vld [vmem:[%s1 + $0x10] sm:$0xff]
      %v41 = vld [vmem:[%s1 + $0x18] sm:$0xff]
      %v42 = vpack.c.bf16 %v39, %v38
      %v43 = vpack.c.bf16 %v41, %v40
      %v44 = vld [vmem:[%s2] sm:$0x3]
      %vm45 = vcmask 23552
      %v47 = vsel %vm45, %v42, 0
      %v50 = vsel %vm45, %v43, 0
      %vm52 = vcmask 1040384
      %vm53 = vcmask 1041408
      %v54 = vsel %vm52, 4294967295, 65535
      %v55 = vsel %vm53, %v54, 0
      %v57 = vand.u32 %v44, %v55
      %59 = vmatprep.subr.bf16.mxu0 0
      %60 = vmatpush1.bf16.msra.mxu0 %v57
      %61 = vmatprep.subr.bf16.mxu0 0
      %62 = vmatpush1.bf16.msra.mxu0 0
      %63 = vmatprep.subr.bf16.mxu0 0
      %64 = vmatpush1.bf16.msra.mxu0 0
      %65 = vmatprep.subr.bf16.mxu0 0
      %66 = vmatpush1.bf16.msra.mxu0 0
      %67 = vmatprep.subr.bf16.mxu0 0
      %68 = vmatpush1.bf16.msra.mxu0 0
      %69 = vmatprep.subr.bf16.mxu0 0
      %70 = vmatpush1.bf16.msra.mxu0 0
      %71 = vmatprep.subr.bf16.mxu0 0
      %72 = vmatpush1.bf16.msra.mxu0 0
      %73 = vmatprep.subr.bf16.mxu0 0
      %74 = vmatpush1.bf16.msra.mxu0 0
      %75 = vmatprep.subr.bf16.mxu0 0
      %76 = vmatpush1.bf16.msra.mxu0 0
      %77 = vmatprep.subr.bf16.mxu0 0
      %78 = vmatpush1.bf16.msra.mxu0 0
      %79 = vmatprep.subr.bf16.mxu0 0
      %80 = vmatpush1.bf16.msra.mxu0 0
      %81 = vmatprep.subr.bf16.mxu0 0
      %82 = vmatpush1.bf16.msra.mxu0 0
      %83 = vmatprep.subr.bf16.mxu0 0
      %84 = vmatpush1.bf16.msra.mxu0 0
      %85 = vmatprep.subr.bf16.mxu0 0
      %86 = vmatpush1.bf16.msra.mxu0 0
      %87 = vmatprep.subr.bf16.mxu0 0
      %88 = vmatpush1.bf16.msra.mxu0 0
      %89 = vmatprep.subr.bf16.mxu0 0
      %90 = vmatpush1.bf16.msra.mxu0 0
      %91 = vmatprep.mubr.bf16.mxu0 0
      %92 = vmatmul.mubr.bf16.gmra.mrb[0].mxu0 %v47
      %v93 = vpop.f32.mrb[0].mxu0
      %v94 = vadd.f32 0.0, %v93
      %v95 = vpop.f32.mrb[0].mxu0
      %v96 = vpop.f32.mrb[0].mxu0
      %v97 = vadd.f32 0.0, %v96
      %v98 = vpop.f32.mrb[0].mxu0
      %99 = vmatprep.mubr.bf16.mxu0 0
      %100 = vmatmul.mubr.bf16.gmra.mrb[0].mxu0 %v50
      %v101 = vpop.f32.mrb[0].mxu0
      %v102 = vadd.f32 0.0, %v101
      %v103 = vpop.f32.mrb[0].mxu0
      %v104 = vpop.f32.mrb[0].mxu0
      %v105 = vadd.f32 0.0, %v104
      %v106 = vpop.f32.mrb[0].mxu0
      %107 = vdwg.mxu0
      %vm108 = vcmask 523264
      %109 = vst.msk [vmem:[#allocation3] sm:$0xff] %vm108, %v94
      %110 = vst.msk [vmem:[#allocation3 + $0x8] sm:$0xff] %vm108, %v97
      %111 = vst.msk [vmem:[#allocation3 + $0x10] sm:$0xff] %vm108, %v102
      %112 = vst.msk [vmem:[#allocation3 + $0x18] sm:$0xff] %vm108, %v105
    $region41: #{tpu_custom_call.1} parent=1 // pred_fallthru
      _
    %v113 = vld [vmem:[%s0] sm:$0xf]
    %v114 = vld [vmem:[%s0 + $0x4] sm:$0xf]
    %v115 = vld [vmem:[%s0 + $0x8] sm:$0xf]
    %v116 = vld [vmem:[%s0 + $0xc] sm:$0xf]
    %s117 = scalar_lea.vmem %s0, 16
    %v118 = vld [vmem:[%s117] sm:$0xf]
    %v119 = vld [vmem:[%s117 + $0x4] sm:$0xf]
    %v120 = vld [vmem:[%s117 + $0x8] sm:$0xf]
    %v121 = vld [vmem:[%s117 + $0xc] sm:$0xf]
    %s122 = scalar_lea.vmem %s0, 32
    %v123 = vld [vmem:[%s122] sm:$0xf]
    %v124 = vld [vmem:[%s122 + $0x4] sm:$0xf]
    %v125 = vld [vmem:[%s122 + $0x8] sm:$0xf]
    %v126 = vld [vmem:[%s122 + $0xc] sm:$0xf]
    %s127 = scalar_lea.vmem %s0, 48
    %v128 = vld [vmem:[%s127] sm:$0xf]
    %v129 = vld [vmem:[%s127 + $0x4] sm:$0xf]
    %v130 = vld [vmem:[%s127 + $0x8] sm:$0xf]
    %v131 = vld [vmem:[%s127 + $0xc] sm:$0xf]
    %s132 = scalar_lea.vmem %s0, 64
    %v133 = vld [vmem:[%s132] sm:$0xf]
    %v134 = vld [vmem:[%s132 + $0x4] sm:$0xf]
    %v135 = vld [vmem:[%s132 + $0x8] sm:$0xf]
    %v136 = vld [vmem:[%s132 + $0xc] sm:$0xf]
    %s137 = scalar_lea.vmem %s0, 80
    %v138 = vld [vmem:[%s137] sm:$0xf]
    %v139 = vld [vmem:[%s137 + $0x4] sm:$0xf]
    %v140 = vld [vmem:[%s137 + $0x8] sm:$0xf]
    %v141 = vld [vmem:[%s137 + $0xc] sm:$0xf]
    %s142 = scalar_lea.vmem %s0, 96
    %v143 = vld [vmem:[%s142] sm:$0xf]
    %v144 = vld [vmem:[%s142 + $0x4] sm:$0xf]
    %v145 = vld [vmem:[%s142 + $0x8] sm:$0xf]
    %v146 = vld [vmem:[%s142 + $0xc] sm:$0xf]
    %s147 = scalar_lea.vmem %s0, 112
    %v148 = vld [vmem:[%s147] sm:$0xf]
    %v149 = vld [vmem:[%s147 + $0x4] sm:$0xf]
    %v150 = vld [vmem:[%s147 + $0x8] sm:$0xf]
    %v151 = vld [vmem:[%s147 + $0xc] sm:$0xf]
    %v156 = vunpack.c.l.b16 %v113
    %v157 = vunpack.c.l.b16 %v114
    %v158 = vunpack.c.l.b16 %v115
    %v159 = vunpack.c.l.b16 %v116
    %v160 = vpack.c.b16 %v157, %v156
    %v161 = vpack.c.b16 %v159, %v158
    %v166 = vunpack.c.l.b16 %v118
    %v167 = vunpack.c.l.b16 %v119
    %v168 = vunpack.c.l.b16 %v120
    %v169 = vunpack.c.l.b16 %v121
    %v170 = vpack.c.b16 %v167, %v166
    %v171 = vpack.c.b16 %v169, %v168
    %v176 = vunpack.c.l.b16 %v123
    %v177 = vunpack.c.l.b16 %v124
    %v178 = vunpack.c.l.b16 %v125
    %v179 = vunpack.c.l.b16 %v126
    %v180 = vpack.c.b16 %v177, %v176
    %v181 = vpack.c.b16 %v179, %v178
    %v186 = vunpack.c.l.b16 %v128
    %v187 = vunpack.c.l.b16 %v129
    %v188 = vunpack.c.l.b16 %v130
    %v189 = vunpack.c.l.b16 %v131
    %v190 = vpack.c.b16 %v187, %v186
    %v191 = vpack.c.b16 %v189, %v188
    %v196 = vunpack.c.l.b16 %v133
    %v197 = vunpack.c.l.b16 %v134
    %v198 = vunpack.c.l.b16 %v135
    %v199 = vunpack.c.l.b16 %v136
    %v200 = vpack.c.b16 %v197, %v196
    %v201 = vpack.c.b16 %v199, %v198
    %v206 = vunpack.c.l.b16 %v138
    %v207 = vunpack.c.l.b16 %v139
    %v208 = vunpack.c.l.b16 %v140
    %v209 = vunpack.c.l.b16 %v141
    %v210 = vpack.c.b16 %v207, %v206
    %v211 = vpack.c.b16 %v209, %v208
    %v216 = vunpack.c.l.b16 %v143
    %v217 = vunpack.c.l.b16 %v144
    %v218 = vunpack.c.l.b16 %v145
    %v219 = vunpack.c.l.b16 %v146
    %v220 = vpack.c.b16 %v217, %v216
    %v221 = vpack.c.b16 %v219, %v218
    %v226 = vunpack.c.l.b16 %v148
    %v227 = vunpack.c.l.b16 %v149
    %v228 = vunpack.c.l.b16 %v150
    %v229 = vunpack.c.l.b16 %v151
    %v230 = vpack.c.b16 %v227, %v226
    %v231 = vpack.c.b16 %v229, %v228
    %v232 = vld [vmem:[%s3] sm:$0x7]
    %v233 = vld [vmem:[%s4] sm:$0x1]
    %v235 = vlaneseq
    %v236 = vshrl.u32 %v235, 7
    %v237 = vsub.s32 0, %v236
    %v238 = vrot.slane %v233, %v237
    %vm240 = vcmask 48128
    %v242 = vsel %vm240, %v160, 0
    %v245 = vsel %vm240, %v161, 0
    %v248 = vsel %vm240, %v170, 0
    %v251 = vsel %vm240, %v171, 0
    %v254 = vsel %vm240, %v180, 0
    %v257 = vsel %vm240, %v181, 0
    %v260 = vsel %vm240, %v190, 0
    %v263 = vsel %vm240, %v191, 0
    %v266 = vsel %vm240, %v200, 0
    %v269 = vsel %vm240, %v201, 0
    %v272 = vsel %vm240, %v210, 0
    %v275 = vsel %vm240, %v211, 0
    %v278 = vsel %vm240, %v220, 0
    %v281 = vsel %vm240, %v221, 0
    %v284 = vsel %vm240, %v230, 0
    %v287 = vsel %vm240, %v231, 0
    %vm289 = vcmask 1042432
    %v291 = vsel %vm289, %v232, 0
    %293 = vmatprep.subr.bf16.mxu0 0
    %294 = vmatpush1.bf16.msra.mxu0 %v291
    %295 = vmatprep.subr.bf16.mxu0 0
    %296 = vmatpush1.bf16.msra.mxu0 0
    %297 = vmatprep.subr.bf16.mxu0 0
    %298 = vmatpush1.bf16.msra.mxu0 0
    %299 = vmatprep.subr.bf16.mxu0 0
    %300 = vmatpush1.bf16.msra.mxu0 0
    %301 = vmatprep.subr.bf16.mxu0 0
    %302 = vmatpush1.bf16.msra.mxu0 0
    %303 = vmatprep.subr.bf16.mxu0 0
    %304 = vmatpush1.bf16.msra.mxu0 0
    %305 = vmatprep.subr.bf16.mxu0 0
    %306 = vmatpush1.bf16.msra.mxu0 0
    %307 = vmatprep.subr.bf16.mxu0 0
    %308 = vmatpush1.bf16.msra.mxu0 0
    %309 = vmatprep.subr.bf16.mxu0 0
    %310 = vmatpush1.bf16.msra.mxu0 0
    %311 = vmatprep.subr.bf16.mxu0 0
    %312 = vmatpush1.bf16.msra.mxu0 0
    %313 = vmatprep.subr.bf16.mxu0 0
    %314 = vmatpush1.bf16.msra.mxu0 0
    %315 = vmatprep.subr.bf16.mxu0 0
    %316 = vmatpush1.bf16.msra.mxu0 0
    %317 = vmatprep.subr.bf16.mxu0 0
    %318 = vmatpush1.bf16.msra.mxu0 0
    %319 = vmatprep.subr.bf16.mxu0 0
    %320 = vmatpush1.bf16.msra.mxu0 0
    %321 = vmatprep.subr.bf16.mxu0 0
    %322 = vmatpush1.bf16.msra.mxu0 0
    %323 = vmatprep.subr.bf16.mxu0 0
    %324 = vmatpush1.bf16.msra.mxu0 0
    %325 = vmatprep.mubr.bf16.mxu0 0
    %326 = vmatmul.mubr.bf16.gmra.mrb[0].mxu0 %v242
    %v327 = vpop.f32.mrb[0].mxu0
    %v328 = vadd.f32 %v238, %v327
    %v329 = vpop.f32.mrb[0].mxu0
    %v330 = vpop.f32.mrb[0].mxu0
    %v331 = vadd.f32 %v238, %v330
    %v332 = vpop.f32.mrb[0].mxu0
    %333 = vmatprep.mubr.bf16.mxu0 0
    %334 = vmatmul.mubr.bf16.gmra.mrb[0].mxu0 %v245
    %v335 = vpop.f32.mrb[0].mxu0
    %v336 = vadd.f32 %v238, %v335
    %v337 = vpop.f32.mrb[0].mxu0
    %v338 = vpop.f32.mrb[0].mxu0
    %v339 = vadd.f32 %v238, %v338
    %v340 = vpop.f32.mrb[0].mxu0
    %341 = vmatprep.mubr.bf16.mxu0 0
    %342 = vmatmul.mubr.bf16.gmra.mrb[0].mxu0 %v248
    %v343 = vpop.f32.mrb[0].mxu0
    %v344 = vadd.f32 %v238, %v343
    %v345 = vpop.f32.mrb[0].mxu0
    %v346 = vpop.f32.mrb[0].mxu0
    %v347 = vadd.f32 %v238, %v346
    %v348 = vpop.f32.mrb[0].mxu0
    %349 = vmatprep.mubr.bf16.mxu0 0
    %350 = vmatmul.mubr.bf16.gmra.mrb[0].mxu0 %v251
    %v351 = vpop.f32.mrb[0].mxu0
    %v352 = vadd.f32 %v238, %v351
    %v353 = vpop.f32.mrb[0].mxu0
    %v354 = vpop.f32.mrb[0].mxu0
    %v355 = vadd.f32 %v238, %v354
    %v356 = vpop.f32.mrb[0].mxu0
    %357 = vmatprep.mubr.bf16.mxu0 0
    %358 = vmatmul.mubr.bf16.gmra.mrb[0].mxu0 %v254
    %v359 = vpop.f32.mrb[0].mxu0
    %v360 = vadd.f32 %v238, %v359
    %v361 = vpop.f32.mrb[0].mxu0
    %v362 = vpop.f32.mrb[0].mxu0
    %v363 = vadd.f32 %v238, %v362
    %v364 = vpop.f32.mrb[0].mxu0
    %365 = vmatprep.mubr.bf16.mxu0 0
    %366 = vmatmul.mubr.bf16.gmra.mrb[0].mxu0 %v257
    %v367 = vpop.f32.mrb[0].mxu0
    %v368 = vadd.f32 %v238, %v367
    %v369 = vpop.f32.mrb[0].mxu0
    %v370 = vpop.f32.mrb[0].mxu0
    %v371 = vadd.f32 %v238, %v370
    %v372 = vpop.f32.mrb[0].mxu0
    %373 = vmatprep.mubr.bf16.mxu0 0
    %374 = vmatmul.mubr.bf16.gmra.mrb[0].mxu0 %v260
    %v375 = vpop.f32.mrb[0].mxu0
    %v376 = vadd.f32 %v238, %v375
    %v377 = vpop.f32.mrb[0].mxu0
    %v378 = vpop.f32.mrb[0].mxu0
    %v379 = vadd.f32 %v238, %v378
    %v380 = vpop.f32.mrb[0].mxu0
    %381 = vmatprep.mubr.bf16.mxu0 0
    %382 = vmatmul.mubr.bf16.gmra.mrb[0].mxu0 %v263
    %v383 = vpop.f32.mrb[0].mxu0
    %v384 = vadd.f32 %v238, %v383
    %v385 = vpop.f32.mrb[0].mxu0
    %v386 = vpop.f32.mrb[0].mxu0
    %v387 = vadd.f32 %v238, %v386
    %v388 = vpop.f32.mrb[0].mxu0
    %389 = vmatprep.mubr.bf16.mxu0 0
    %390 = vmatmul.mubr.bf16.gmra.mrb[0].mxu0 %v266
    %v391 = vpop.f32.mrb[0].mxu0
    %v392 = vadd.f32 %v238, %v391
    %v393 = vpop.f32.mrb[0].mxu0
    %v394 = vpop.f32.mrb[0].mxu0
    %v395 = vadd.f32 %v238, %v394
    %v396 = vpop.f32.mrb[0].mxu0
    %397 = vmatprep.mubr.bf16.mxu0 0
    %398 = vmatmul.mubr.bf16.gmra.mrb[0].mxu0 %v269
    %v399 = vpop.f32.mrb[0].mxu0
    %v400 = vadd.f32 %v238, %v399
    %v401 = vpop.f32.mrb[0].mxu0
    %v402 = vpop.f32.mrb[0].mxu0
    %v403 = vadd.f32 %v238, %v402
    %v404 = vpop.f32.mrb[0].mxu0
    %405 = vmatprep.mubr.bf16.mxu0 0
    %406 = vmatmul.mubr.bf16.gmra.mrb[0].mxu0 %v272
    %v407 = vpop.f32.mrb[0].mxu0
    %v408 = vadd.f32 %v238, %v407
    %v409 = vpop.f32.mrb[0].mxu0
    %v410 = vpop.f32.mrb[0].mxu0
    %v411 = vadd.f32 %v238, %v410
    %v412 = vpop.f32.mrb[0].mxu0
    %413 = vmatprep.mubr.bf16.mxu0 0
    %414 = vmatmul.mubr.bf16.gmra.mrb[0].mxu0 %v275
    %v415 = vpop.f32.mrb[0].mxu0
    %v416 = vadd.f32 %v238, %v415
    %v417 = vpop.f32.mrb[0].mxu0
    %v418 = vpop.f32.mrb[0].mxu0
    %v419 = vadd.f32 %v238, %v418
    %v420 = vpop.f32.mrb[0].mxu0
    %421 = vmatprep.mubr.bf16.mxu0 0
    %422 = vmatmul.mubr.bf16.gmra.mrb[0].mxu0 %v278
    %v423 = vpop.f32.mrb[0].mxu0
    %v424 = vadd.f32 %v238, %v423
    %v425 = vpop.f32.mrb[0].mxu0
    %v426 = vpop.f32.mrb[0].mxu0
    %v427 = vadd.f32 %v238, %v426
    %v428 = vpop.f32.mrb[0].mxu0
    %429 = vmatprep.mubr.bf16.mxu0 0
    %430 = vmatmul.mubr.bf16.gmra.mrb[0].mxu0 %v281
    %v431 = vpop.f32.mrb[0].mxu0
    %v432 = vadd.f32 %v238, %v431
    %v433 = vpop.f32.mrb[0].mxu0
    %v434 = vpop.f32.mrb[0].mxu0
    %v435 = vadd.f32 %v238, %v434
    %v436 = vpop.f32.mrb[0].mxu0
    %437 = vmatprep.mubr.bf16.mxu0 0
    %438 = vmatmul.mubr.bf16.gmra.mrb[0].mxu0 %v284
    %v439 = vpop.f32.mrb[0].mxu0
    %v440 = vadd.f32 %v238, %v439
    %v441 = vpop.f32.mrb[0].mxu0
    %v442 = vpop.f32.mrb[0].mxu0
    %v443 = vadd.f32 %v238, %v442
    %v444 = vpop.f32.mrb[0].mxu0
    %445 = vmatprep.mubr.bf16.mxu0 0
    %446 = vmatmul.mubr.bf16.gmra.mrb[0].mxu0 %v287
    %v447 = vpop.f32.mrb[0].mxu0
    %v448 = vadd.f32 %v238, %v447
    %v449 = vpop.f32.mrb[0].mxu0
    %v450 = vpop.f32.mrb[0].mxu0
    %v451 = vadd.f32 %v238, %v450
    %v452 = vpop.f32.mrb[0].mxu0
    %453 = vdwg.mxu0
    %v454 = vld [vmem:[#allocation3] sm:$0xff]
    %v455 = vld [vmem:[#allocation3 + $0x8] sm:$0xff]
    %v456 = vld [vmem:[#allocation3 + $0x10] sm:$0xff]
    %v457 = vld [vmem:[#allocation3 + $0x18] sm:$0xff]
    %v458 = vsub.f32 %v328, %v454
    %v459 = vsub.f32 %v331, %v455
    %v460 = vsub.f32 %v336, %v456
    %v461 = vsub.f32 %v339, %v457
    %v462 = vsub.f32 %v344, %v454
    %v463 = vsub.f32 %v347, %v455
    %v464 = vsub.f32 %v352, %v456
    %v465 = vsub.f32 %v355, %v457
    %v466 = vsub.f32 %v360, %v454
    %v467 = vsub.f32 %v363, %v455
    %v468 = vsub.f32 %v368, %v456
    %v469 = vsub.f32 %v371, %v457
    %v470 = vsub.f32 %v376, %v454
    %v471 = vsub.f32 %v379, %v455
    %v472 = vsub.f32 %v384, %v456
    %v473 = vsub.f32 %v387, %v457
    %v474 = vsub.f32 %v392, %v454
    %v475 = vsub.f32 %v395, %v455
    %v476 = vsub.f32 %v400, %v456
    %v477 = vsub.f32 %v403, %v457
    %v478 = vsub.f32 %v408, %v454
    %v479 = vsub.f32 %v411, %v455
    %v480 = vsub.f32 %v416, %v456
    %v481 = vsub.f32 %v419, %v457
    %v482 = vsub.f32 %v424, %v454
    %v483 = vsub.f32 %v427, %v455
    %v484 = vsub.f32 %v432, %v456
    %v485 = vsub.f32 %v435, %v457
    %v486 = vsub.f32 %v440, %v454
    %v487 = vsub.f32 %v443, %v455
    %v488 = vsub.f32 %v448, %v456
    %v489 = vsub.f32 %v451, %v457
    %v490 = vmax.f32 %v458, 0.0
    %v491 = vmax.f32 %v459, 0.0
    %v492 = vmax.f32 %v460, 0.0
    %v493 = vmax.f32 %v461, 0.0
    %v494 = vmax.f32 %v462, 0.0
    %v495 = vmax.f32 %v463, 0.0
    %v496 = vmax.f32 %v464, 0.0
    %v497 = vmax.f32 %v465, 0.0
    %v498 = vmax.f32 %v466, 0.0
    %v499 = vmax.f32 %v467, 0.0
    %v500 = vmax.f32 %v468, 0.0
    %v501 = vmax.f32 %v469, 0.0
    %v502 = vmax.f32 %v470, 0.0
    %v503 = vmax.f32 %v471, 0.0
    %v504 = vmax.f32 %v472, 0.0
    %v505 = vmax.f32 %v473, 0.0
    %v506 = vmax.f32 %v474, 0.0
    %v507 = vmax.f32 %v475, 0.0
    %v508 = vmax.f32 %v476, 0.0
    %v509 = vmax.f32 %v477, 0.0
    %v510 = vmax.f32 %v478, 0.0
    %v511 = vmax.f32 %v479, 0.0
    %v512 = vmax.f32 %v480, 0.0
    %v513 = vmax.f32 %v481, 0.0
    %v514 = vmax.f32 %v482, 0.0
    %v515 = vmax.f32 %v483, 0.0
    %v516 = vmax.f32 %v484, 0.0
    %v517 = vmax.f32 %v485, 0.0
    %v518 = vmax.f32 %v486, 0.0
    %v519 = vmax.f32 %v487, 0.0
    %v520 = vmax.f32 %v488, 0.0
    %v521 = vmax.f32 %v489, 0.0
    %v522 = vpack.c.bf16 %v491, %v490
    %v523 = vpack.c.bf16 %v493, %v492
    %v524 = vpack.c.bf16 %v495, %v494
    %v525 = vpack.c.bf16 %v497, %v496
    %v526 = vpack.c.bf16 %v499, %v498
    %v527 = vpack.c.bf16 %v501, %v500
    %v528 = vpack.c.bf16 %v503, %v502
    %v529 = vpack.c.bf16 %v505, %v504
    %v530 = vpack.c.bf16 %v507, %v506
    %v531 = vpack.c.bf16 %v509, %v508
    %v532 = vpack.c.bf16 %v511, %v510
    %v533 = vpack.c.bf16 %v513, %v512
    %v534 = vpack.c.bf16 %v515, %v514
    %v535 = vpack.c.bf16 %v517, %v516
    %v536 = vpack.c.bf16 %v519, %v518
    %v537 = vpack.c.bf16 %v521, %v520
    %v538 = vld [vmem:[%s5] sm:$0xf]
    %v539 = vld [vmem:[%s5 + $0x4] sm:$0xf]
    %v540 = vld [vmem:[%s5 + $0x8] sm:$0xf]
    %v541 = vld [vmem:[%s5 + $0xc] sm:$0xf]
    %v542 = vld [vmem:[%s5 + $0x10] sm:$0xf]
    %v543 = vld [vmem:[%s5 + $0x14] sm:$0xf]
    %v544 = vld [vmem:[%s5 + $0x18] sm:$0xf]
    %v545 = vld [vmem:[%s5 + $0x1c] sm:$0xf]
    %v546 = vld [vmem:[%s6] sm:$0x1]
    %v548 = vlaneseq
    %v549 = vshrl.u32 %v548, 7
    %v550 = vsub.s32 0, %v549
    %v551 = vrot.slane %v546, %v550
    %v561 = vunpack.c.l.b16 %v538
    %v562 = vunpack.c.l.b16 %v539
    %v563 = vunpack.c.l.b16 %v540
    %v564 = vunpack.c.l.b16 %v541
    %v565 = vunpack.c.l.b16 %v542
    %v566 = vunpack.c.l.b16 %v543
    %v567 = vunpack.c.l.b16 %v544
    %v568 = vunpack.c.l.b16 %v545
    %v569 = vpack.c.b16 %v562, %v561
    %v570 = vpack.c.b16 %v564, %v563
    %v571 = vpack.c.b16 %v566, %v565
    %v572 = vpack.c.b16 %v568, %v567
    %vm577 = vcmask 523264
    %v579 = vsel %vm577, %v522, 0
    %v582 = vsel %vm577, %v523, 0
    %v585 = vsel %vm577, %v524, 0
    %v588 = vsel %vm577, %v525, 0
    %v591 = vsel %vm577, %v526, 0
    %v594 = vsel %vm577, %v527, 0
    %v597 = vsel %vm577, %v528, 0
    %v600 = vsel %vm577, %v529, 0
    %v603 = vsel %vm577, %v530, 0
    %v606 = vsel %vm577, %v531, 0
    %v609 = vsel %vm577, %v532, 0
    %v612 = vsel %vm577, %v533, 0
    %v615 = vsel %vm577, %v534, 0
    %v618 = vsel %vm577, %v535, 0
    %v621 = vsel %vm577, %v536, 0
    %v624 = vsel %vm577, %v537, 0
    %626 = vmatprep.subr.bf16.mxu0 0
    %627 = vmatpush1.bf16.msra.mxu0 %v569
    %628 = vmatprep.subr.bf16.mxu0 0
    %629 = vmatpush1.bf16.msra.mxu0 %v570
    %630 = vmatprep.subr.bf16.mxu0 0
    %631 = vmatpush1.bf16.msra.mxu0 %v571
    %632 = vmatprep.subr.bf16.mxu0 0
    %633 = vmatpush1.bf16.msra.mxu0 %v572
    %634 = vmatprep.subr.bf16.mxu0 0
    %635 = vmatpush1.bf16.msra.mxu0 0
    %636 = vmatprep.subr.bf16.mxu0 0
    %637 = vmatpush1.bf16.msra.mxu0 0
    %638 = vmatprep.subr.bf16.mxu0 0
    %639 = vmatpush1.bf16.msra.mxu0 0
    %640 = vmatprep.subr.bf16.mxu0 0
    %641 = vmatpush1.bf16.msra.mxu0 0
    %642 = vmatprep.subr.bf16.mxu0 0
    %643 = vmatpush1.bf16.msra.mxu0 0
    %644 = vmatprep.subr.bf16.mxu0 0
    %645 = vmatpush1.bf16.msra.mxu0 0
    %646 = vmatprep.subr.bf16.mxu0 0
    %647 = vmatpush1.bf16.msra.mxu0 0
    %648 = vmatprep.subr.bf16.mxu0 0
    %649 = vmatpush1.bf16.msra.mxu0 0
    %650 = vmatprep.subr.bf16.mxu0 0
    %651 = vmatpush1.bf16.msra.mxu0 0
    %652 = vmatprep.subr.bf16.mxu0 0
    %653 = vmatpush1.bf16.msra.mxu0 0
    %654 = vmatprep.subr.bf16.mxu0 0
    %655 = vmatpush1.bf16.msra.mxu0 0
    %656 = vmatprep.subr.bf16.mxu0 0
    %657 = vmatpush1.bf16.msra.mxu0 0
    %658 = vmatprep.mubr.bf16.mxu0 0
    %659 = vmatmul.mubr.bf16.gmra.mrb[0].mxu0 %v579
    %v660 = vpop.f32.mrb[0].mxu0
    %v661 = vadd.f32 %v551, %v660
    %v662 = vpop.f32.mrb[0].mxu0
    %v663 = vpop.f32.mrb[0].mxu0
    %v664 = vadd.f32 %v551, %v663
    %v665 = vpop.f32.mrb[0].mxu0
    %666 = vmatprep.mubr.bf16.mxu0 0
    %667 = vmatmul.mubr.bf16.gmra.mrb[0].mxu0 %v582
    %v668 = vpop.f32.mrb[0].mxu0
    %v669 = vadd.f32 %v551, %v668
    %v670 = vpop.f32.mrb[0].mxu0
    %v671 = vpop.f32.mrb[0].mxu0
    %v672 = vadd.f32 %v551, %v671
    %v673 = vpop.f32.mrb[0].mxu0
    %674 = vmatprep.mubr.bf16.mxu0 0
    %675 = vmatmul.mubr.bf16.gmra.mrb[0].mxu0 %v585
    %v676 = vpop.f32.mrb[0].mxu0
    %v677 = vadd.f32 %v551, %v676
    %v678 = vpop.f32.mrb[0].mxu0
    %v679 = vpop.f32.mrb[0].mxu0
    %v680 = vadd.f32 %v551, %v679
    %v681 = vpop.f32.mrb[0].mxu0
    %682 = vmatprep.mubr.bf16.mxu0 0
    %683 = vmatmul.mubr.bf16.gmra.mrb[0].mxu0 %v588
    %v684 = vpop.f32.mrb[0].mxu0
    %v685 = vadd.f32 %v551, %v684
    %v686 = vpop.f32.mrb[0].mxu0
    %v687 = vpop.f32.mrb[0].mxu0
    %v688 = vadd.f32 %v551, %v687
    %v689 = vpop.f32.mrb[0].mxu0
    %690 = vmatprep.mubr.bf16.mxu0 0
    %691 = vmatmul.mubr.bf16.gmra.mrb[0].mxu0 %v591
    %v692 = vpop.f32.mrb[0].mxu0
    %v693 = vadd.f32 %v551, %v692
    %v694 = vpop.f32.mrb[0].mxu0
    %v695 = vpop.f32.mrb[0].mxu0
    %v696 = vadd.f32 %v551, %v695
    %v697 = vpop.f32.mrb[0].mxu0
    %698 = vmatprep.mubr.bf16.mxu0 0
    %699 = vmatmul.mubr.bf16.gmra.mrb[0].mxu0 %v594
    %v700 = vpop.f32.mrb[0].mxu0
    %v701 = vadd.f32 %v551, %v700
    %v702 = vpop.f32.mrb[0].mxu0
    %v703 = vpop.f32.mrb[0].mxu0
    %v704 = vadd.f32 %v551, %v703
    %v705 = vpop.f32.mrb[0].mxu0
    %706 = vmatprep.mubr.bf16.mxu0 0
    %707 = vmatmul.mubr.bf16.gmra.mrb[0].mxu0 %v597
    %v708 = vpop.f32.mrb[0].mxu0
    %v709 = vadd.f32 %v551, %v708
    %v710 = vpop.f32.mrb[0].mxu0
    %v711 = vpop.f32.mrb[0].mxu0
    %v712 = vadd.f32 %v551, %v711
    %v713 = vpop.f32.mrb[0].mxu0
    %714 = vmatprep.mubr.bf16.mxu0 0
    %715 = vmatmul.mubr.bf16.gmra.mrb[0].mxu0 %v600
    %v716 = vpop.f32.mrb[0].mxu0
    %v717 = vadd.f32 %v551, %v716
    %v718 = vpop.f32.mrb[0].mxu0
    %v719 = vpop.f32.mrb[0].mxu0
    %v720 = vadd.f32 %v551, %v719
    %v721 = vpop.f32.mrb[0].mxu0
    %722 = vmatprep.mubr.bf16.mxu0 0
    %723 = vmatmul.mubr.bf16.gmra.mrb[0].mxu0 %v603
    %v724 = vpop.f32.mrb[0].mxu0
    %v725 = vadd.f32 %v551, %v724
    %v726 = vpop.f32.mrb[0].mxu0
    %v727 = vpop.f32.mrb[0].mxu0
    %v728 = vadd.f32 %v551, %v727
    %v729 = vpop.f32.mrb[0].mxu0
    %730 = vmatprep.mubr.bf16.mxu0 0
    %731 = vmatmul.mubr.bf16.gmra.mrb[0].mxu0 %v606
    %v732 = vpop.f32.mrb[0].mxu0
    %v733 = vadd.f32 %v551, %v732
    %v734 = vpop.f32.mrb[0].mxu0
    %v735 = vpop.f32.mrb[0].mxu0
    %v736 = vadd.f32 %v551, %v735
    %v737 = vpop.f32.mrb[0].mxu0
    %738 = vmatprep.mubr.bf16.mxu0 0
    %739 = vmatmul.mubr.bf16.gmra.mrb[0].mxu0 %v609
    %v740 = vpop.f32.mrb[0].mxu0
    %v741 = vadd.f32 %v551, %v740
    %v742 = vpop.f32.mrb[0].mxu0
    %v743 = vpop.f32.mrb[0].mxu0
    %v744 = vadd.f32 %v551, %v743
    %v745 = vpop.f32.mrb[0].mxu0
    %746 = vmatprep.mubr.bf16.mxu0 0
    %747 = vmatmul.mubr.bf16.gmra.mrb[0].mxu0 %v612
    %v748 = vpop.f32.mrb[0].mxu0
    %v749 = vadd.f32 %v551, %v748
    %v750 = vpop.f32.mrb[0].mxu0
    %v751 = vpop.f32.mrb[0].mxu0
    %v752 = vadd.f32 %v551, %v751
    %v753 = vpop.f32.mrb[0].mxu0
    %754 = vmatprep.mubr.bf16.mxu0 0
    %755 = vmatmul.mubr.bf16.gmra.mrb[0].mxu0 %v615
    %v756 = vpop.f32.mrb[0].mxu0
    %v757 = vadd.f32 %v551, %v756
    %v758 = vpop.f32.mrb[0].mxu0
    %v759 = vpop.f32.mrb[0].mxu0
    %v760 = vadd.f32 %v551, %v759
    %v761 = vpop.f32.mrb[0].mxu0
    %762 = vmatprep.mubr.bf16.mxu0 0
    %763 = vmatmul.mubr.bf16.gmra.mrb[0].mxu0 %v618
    %v764 = vpop.f32.mrb[0].mxu0
    %v765 = vadd.f32 %v551, %v764
    %v766 = vpop.f32.mrb[0].mxu0
    %v767 = vpop.f32.mrb[0].mxu0
    %v768 = vadd.f32 %v551, %v767
    %v769 = vpop.f32.mrb[0].mxu0
    %770 = vmatprep.mubr.bf16.mxu0 0
    %771 = vmatmul.mubr.bf16.gmra.mrb[0].mxu0 %v621
    %v772 = vpop.f32.mrb[0].mxu0
    %v773 = vadd.f32 %v551, %v772
    %v774 = vpop.f32.mrb[0].mxu0
    %v775 = vpop.f32.mrb[0].mxu0
    %v776 = vadd.f32 %v551, %v775
    %v777 = vpop.f32.mrb[0].mxu0
    %778 = vmatprep.mubr.bf16.mxu0 0
    %779 = vmatmul.mubr.bf16.gmra.mrb[0].mxu0 %v624
    %v780 = vpop.f32.mrb[0].mxu0
    %v781 = vadd.f32 %v551, %v780
    %v782 = vpop.f32.mrb[0].mxu0
    %v783 = vpop.f32.mrb[0].mxu0
    %v784 = vadd.f32 %v551, %v783
    %v785 = vpop.f32.mrb[0].mxu0
    %786 = vdwg.mxu0
    %v787 = vmax.f32 %v661, 0.0
    %v788 = vmax.f32 %v664, 0.0
    %v789 = vmax.f32 %v669, 0.0
    %v790 = vmax.f32 %v672, 0.0
    %v791 = vmax.f32 %v677, 0.0
    %v792 = vmax.f32 %v680, 0.0
    %v793 = vmax.f32 %v685, 0.0
    %v794 = vmax.f32 %v688, 0.0
    %v795 = vmax.f32 %v693, 0.0
    %v796 = vmax.f32 %v696, 0.0
    %v797 = vmax.f32 %v701, 0.0
    %v798 = vmax.f32 %v704, 0.0
    %v799 = vmax.f32 %v709, 0.0
    %v800 = vmax.f32 %v712, 0.0
    %v801 = vmax.f32 %v717, 0.0
    %v802 = vmax.f32 %v720, 0.0
    %v803 = vmax.f32 %v725, 0.0
    %v804 = vmax.f32 %v728, 0.0
    %v805 = vmax.f32 %v733, 0.0
    %v806 = vmax.f32 %v736, 0.0
    %v807 = vmax.f32 %v741, 0.0
    %v808 = vmax.f32 %v744, 0.0
    %v809 = vmax.f32 %v749, 0.0
    %v810 = vmax.f32 %v752, 0.0
    %v811 = vmax.f32 %v757, 0.0
    %v812 = vmax.f32 %v760, 0.0
    %v813 = vmax.f32 %v765, 0.0
    %v814 = vmax.f32 %v768, 0.0
    %v815 = vmax.f32 %v773, 0.0
    %v816 = vmax.f32 %v776, 0.0
    %v817 = vmax.f32 %v781, 0.0
    %v818 = vmax.f32 %v784, 0.0
    %v819 = vpack.c.bf16 %v788, %v787
    %v820 = vpack.c.bf16 %v790, %v789
    %v821 = vpack.c.bf16 %v792, %v791
    %v822 = vpack.c.bf16 %v794, %v793
    %v823 = vpack.c.bf16 %v796, %v795
    %v824 = vpack.c.bf16 %v798, %v797
    %v825 = vpack.c.bf16 %v800, %v799
    %v826 = vpack.c.bf16 %v802, %v801
    %v827 = vpack.c.bf16 %v804, %v803
    %v828 = vpack.c.bf16 %v806, %v805
    %v829 = vpack.c.bf16 %v808, %v807
    %v830 = vpack.c.bf16 %v810, %v809
    %v831 = vpack.c.bf16 %v812, %v811
    %v832 = vpack.c.bf16 %v814, %v813
    %v833 = vpack.c.bf16 %v816, %v815
    %v834 = vpack.c.bf16 %v818, %v817
    %v835 = vld [vmem:[%s7] sm:$0xf]
    %v836 = vld [vmem:[%s7 + $0x4] sm:$0xf]
    %v837 = vld [vmem:[%s7 + $0x8] sm:$0xf]
    %v838 = vld [vmem:[%s7 + $0xc] sm:$0xf]
    %v839 = vld [vmem:[%s7 + $0x10] sm:$0xf]
    %v840 = vld [vmem:[%s7 + $0x14] sm:$0xf]
    %v841 = vld [vmem:[%s7 + $0x18] sm:$0xf]
    %v842 = vld [vmem:[%s7 + $0x1c] sm:$0xf]
    %v843 = vld [vmem:[%s8] sm:$0x1]
    %v845 = vlaneseq
    %v846 = vshrl.u32 %v845, 7
    %v847 = vsub.s32 0, %v846
    %v848 = vrot.slane %v843, %v847
    %v858 = vunpack.c.l.b16 %v835
    %v859 = vunpack.c.l.b16 %v836
    %v860 = vunpack.c.l.b16 %v837
    %v861 = vunpack.c.l.b16 %v838
    %v862 = vunpack.c.l.b16 %v839
    %v863 = vunpack.c.l.b16 %v840
    %v864 = vunpack.c.l.b16 %v841
    %v865 = vunpack.c.l.b16 %v842
    %v866 = vpack.c.b16 %v859, %v858
    %v867 = vpack.c.b16 %v861, %v860
    %v868 = vpack.c.b16 %v863, %v862
    %v869 = vpack.c.b16 %v865, %v864
    %v875 = vsel %vm577, %v819, 0
    %v878 = vsel %vm577, %v820, 0
    %v881 = vsel %vm577, %v821, 0
    %v884 = vsel %vm577, %v822, 0
    %v887 = vsel %vm577, %v823, 0
    %v890 = vsel %vm577, %v824, 0
    %v893 = vsel %vm577, %v825, 0
    %v896 = vsel %vm577, %v826, 0
    %v899 = vsel %vm577, %v827, 0
    %v902 = vsel %vm577, %v828, 0
    %v905 = vsel %vm577, %v829, 0
    %v908 = vsel %vm577, %v830, 0
    %v911 = vsel %vm577, %v831, 0
    %v914 = vsel %vm577, %v832, 0
    %v917 = vsel %vm577, %v833, 0
    %v920 = vsel %vm577, %v834, 0
    %922 = vmatprep.subr.bf16.mxu0 0
    %923 = vmatpush1.bf16.msra.mxu0 %v866
    %924 = vmatprep.subr.bf16.mxu0 0
    %925 = vmatpush1.bf16.msra.mxu0 %v867
    %926 = vmatprep.subr.bf16.mxu0 0
    %927 = vmatpush1.bf16.msra.mxu0 %v868
    %928 = vmatprep.subr.bf16.mxu0 0
    %929 = vmatpush1.bf16.msra.mxu0 %v869
    %930 = vmatprep.subr.bf16.mxu0 0
    %931 = vmatpush1.bf16.msra.mxu0 0
    %932 = vmatprep.subr.bf16.mxu0 0
    %933 = vmatpush1.bf16.msra.mxu0 0
    %934 = vmatprep.subr.bf16.mxu0 0
    %935 = vmatpush1.bf16.msra.mxu0 0
    %936 = vmatprep.subr.bf16.mxu0 0
    %937 = vmatpush1.bf16.msra.mxu0 0
    %938 = vmatprep.subr.bf16.mxu0 0
    %939 = vmatpush1.bf16.msra.mxu0 0
    %940 = vmatprep.subr.bf16.mxu0 0
    %941 = vmatpush1.bf16.msra.mxu0 0
    %942 = vmatprep.subr.bf16.mxu0 0
    %943 = vmatpush1.bf16.msra.mxu0 0
    %944 = vmatprep.subr.bf16.mxu0 0
    %945 = vmatpush1.bf16.msra.mxu0 0
    %946 = vmatprep.subr.bf16.mxu0 0
    %947 = vmatpush1.bf16.msra.mxu0 0
    %948 = vmatprep.subr.bf16.mxu0 0
    %949 = vmatpush1.bf16.msra.mxu0 0
    %950 = vmatprep.subr.bf16.mxu0 0
    %951 = vmatpush1.bf16.msra.mxu0 0
    %952 = vmatprep.subr.bf16.mxu0 0
    %953 = vmatpush1.bf16.msra.mxu0 0
    %954 = vmatprep.mubr.bf16.mxu0 0
    %955 = vmatmul.mubr.bf16.gmra.mrb[0].mxu0 %v875
    %v956 = vpop.f32.mrb[0].mxu0
    %v957 = vadd.f32 %v848, %v956
    %v958 = vpop.f32.mrb[0].mxu0
    %v959 = vpop.f32.mrb[0].mxu0
    %v960 = vadd.f32 %v848, %v959
    %v961 = vpop.f32.mrb[0].mxu0
    %962 = vmatprep.mubr.bf16.mxu0 0
    %963 = vmatmul.mubr.bf16.gmra.mrb[0].mxu0 %v878
    %v964 = vpop.f32.mrb[0].mxu0
    %v965 = vadd.f32 %v848, %v964
    %v966 = vpop.f32.mrb[0].mxu0
    %v967 = vpop.f32.mrb[0].mxu0
    %v968 = vadd.f32 %v848, %v967
    %v969 = vpop.f32.mrb[0].mxu0
    %970 = vmatprep.mubr.bf16.mxu0 0
    %971 = vmatmul.mubr.bf16.gmra.mrb[0].mxu0 %v881
    %v972 = vpop.f32.mrb[0].mxu0
    %v973 = vadd.f32 %v848, %v972
    %v974 = vpop.f32.mrb[0].mxu0
    %v975 = vpop.f32.mrb[0].mxu0
    %v976 = vadd.f32 %v848, %v975
    %v977 = vpop.f32.mrb[0].mxu0
    %978 = vmatprep.mubr.bf16.mxu0 0
    %979 = vmatmul.mubr.bf16.gmra.mrb[0].mxu0 %v884
    %v980 = vpop.f32.mrb[0].mxu0
    %v981 = vadd.f32 %v848, %v980
    %v982 = vpop.f32.mrb[0].mxu0
    %v983 = vpop.f32.mrb[0].mxu0
    %v984 = vadd.f32 %v848, %v983
    %v985 = vpop.f32.mrb[0].mxu0
    %986 = vmatprep.mubr.bf16.mxu0 0
    %987 = vmatmul.mubr.bf16.gmra.mrb[0].mxu0 %v887
    %v988 = vpop.f32.mrb[0].mxu0
    %v989 = vadd.f32 %v848, %v988
    %v990 = vpop.f32.mrb[0].mxu0
    %v991 = vpop.f32.mrb[0].mxu0
    %v992 = vadd.f32 %v848, %v991
    %v993 = vpop.f32.mrb[0].mxu0
    %994 = vmatprep.mubr.bf16.mxu0 0
    %995 = vmatmul.mubr.bf16.gmra.mrb[0].mxu0 %v890
    %v996 = vpop.f32.mrb[0].mxu0
    %v997 = vadd.f32 %v848, %v996
    %v998 = vpop.f32.mrb[0].mxu0
    %v999 = vpop.f32.mrb[0].mxu0
    %v1000 = vadd.f32 %v848, %v999
    %v1001 = vpop.f32.mrb[0].mxu0
    %1002 = vmatprep.mubr.bf16.mxu0 0
    %1003 = vmatmul.mubr.bf16.gmra.mrb[0].mxu0 %v893
    %v1004 = vpop.f32.mrb[0].mxu0
    %v1005 = vadd.f32 %v848, %v1004
    %v1006 = vpop.f32.mrb[0].mxu0
    %v1007 = vpop.f32.mrb[0].mxu0
    %v1008 = vadd.f32 %v848, %v1007
    %v1009 = vpop.f32.mrb[0].mxu0
    %1010 = vmatprep.mubr.bf16.mxu0 0
    %1011 = vmatmul.mubr.bf16.gmra.mrb[0].mxu0 %v896
    %v1012 = vpop.f32.mrb[0].mxu0
    %v1013 = vadd.f32 %v848, %v1012
    %v1014 = vpop.f32.mrb[0].mxu0
    %v1015 = vpop.f32.mrb[0].mxu0
    %v1016 = vadd.f32 %v848, %v1015
    %v1017 = vpop.f32.mrb[0].mxu0
    %1018 = vmatprep.mubr.bf16.mxu0 0
    %1019 = vmatmul.mubr.bf16.gmra.mrb[0].mxu0 %v899
    %v1020 = vpop.f32.mrb[0].mxu0
    %v1021 = vadd.f32 %v848, %v1020
    %v1022 = vpop.f32.mrb[0].mxu0
    %v1023 = vpop.f32.mrb[0].mxu0
    %v1024 = vadd.f32 %v848, %v1023
    %v1025 = vpop.f32.mrb[0].mxu0
    %1026 = vmatprep.mubr.bf16.mxu0 0
    %1027 = vmatmul.mubr.bf16.gmra.mrb[0].mxu0 %v902
    %v1028 = vpop.f32.mrb[0].mxu0
    %v1029 = vadd.f32 %v848, %v1028
    %v1030 = vpop.f32.mrb[0].mxu0
    %v1031 = vpop.f32.mrb[0].mxu0
    %v1032 = vadd.f32 %v848, %v1031
    %v1033 = vpop.f32.mrb[0].mxu0
    %1034 = vmatprep.mubr.bf16.mxu0 0
    %1035 = vmatmul.mubr.bf16.gmra.mrb[0].mxu0 %v905
    %v1036 = vpop.f32.mrb[0].mxu0
    %v1037 = vadd.f32 %v848, %v1036
    %v1038 = vpop.f32.mrb[0].mxu0
    %v1039 = vpop.f32.mrb[0].mxu0
    %v1040 = vadd.f32 %v848, %v1039
    %v1041 = vpop.f32.mrb[0].mxu0
    %1042 = vmatprep.mubr.bf16.mxu0 0
    %1043 = vmatmul.mubr.bf16.gmra.mrb[0].mxu0 %v908
    %v1044 = vpop.f32.mrb[0].mxu0
    %v1045 = vadd.f32 %v848, %v1044
    %v1046 = vpop.f32.mrb[0].mxu0
    %v1047 = vpop.f32.mrb[0].mxu0
    %v1048 = vadd.f32 %v848, %v1047
    %v1049 = vpop.f32.mrb[0].mxu0
    %1050 = vmatprep.mubr.bf16.mxu0 0
    %1051 = vmatmul.mubr.bf16.gmra.mrb[0].mxu0 %v911
    %v1052 = vpop.f32.mrb[0].mxu0
    %v1053 = vadd.f32 %v848, %v1052
    %v1054 = vpop.f32.mrb[0].mxu0
    %v1055 = vpop.f32.mrb[0].mxu0
    %v1056 = vadd.f32 %v848, %v1055
    %v1057 = vpop.f32.mrb[0].mxu0
    %1058 = vmatprep.mubr.bf16.mxu0 0
    %1059 = vmatmul.mubr.bf16.gmra.mrb[0].mxu0 %v914
    %v1060 = vpop.f32.mrb[0].mxu0
    %v1061 = vadd.f32 %v848, %v1060
    %v1062 = vpop.f32.mrb[0].mxu0
    %v1063 = vpop.f32.mrb[0].mxu0
    %v1064 = vadd.f32 %v848, %v1063
    %v1065 = vpop.f32.mrb[0].mxu0
    %1066 = vmatprep.mubr.bf16.mxu0 0
    %1067 = vmatmul.mubr.bf16.gmra.mrb[0].mxu0 %v917
    %v1068 = vpop.f32.mrb[0].mxu0
    %v1069 = vadd.f32 %v848, %v1068
    %v1070 = vpop.f32.mrb[0].mxu0
    %v1071 = vpop.f32.mrb[0].mxu0
    %v1072 = vadd.f32 %v848, %v1071
    %v1073 = vpop.f32.mrb[0].mxu0
    %1074 = vmatprep.mubr.bf16.mxu0 0
    %1075 = vmatmul.mubr.bf16.gmra.mrb[0].mxu0 %v920
    %v1076 = vpop.f32.mrb[0].mxu0
    %v1077 = vadd.f32 %v848, %v1076
    %v1078 = vpop.f32.mrb[0].mxu0
    %v1079 = vpop.f32.mrb[0].mxu0
    %v1080 = vadd.f32 %v848, %v1079
    %v1081 = vpop.f32.mrb[0].mxu0
    %1082 = vdwg.mxu0
    %v1083 = vmax.f32 %v957, %v973
    %v1084 = vmax.f32 %v960, %v976
    %v1085 = vmax.f32 %v965, %v981
    %v1086 = vmax.f32 %v968, %v984
    %v1087 = vmax.f32 %v1083, %v989
    %v1088 = vmax.f32 %v1084, %v992
    %v1089 = vmax.f32 %v1085, %v997
    %v1090 = vmax.f32 %v1086, %v1000
    %v1091 = vmax.f32 %v1087, %v1005
    %v1092 = vmax.f32 %v1088, %v1008
    %v1093 = vmax.f32 %v1089, %v1013
    %v1094 = vmax.f32 %v1090, %v1016
    %v1095 = vmax.f32 %v1091, %v1021
    %v1096 = vmax.f32 %v1092, %v1024
    %v1097 = vmax.f32 %v1093, %v1029
    %v1098 = vmax.f32 %v1094, %v1032
    %v1099 = vmax.f32 %v1095, %v1037
    %v1100 = vmax.f32 %v1096, %v1040
    %v1101 = vmax.f32 %v1097, %v1045
    %v1102 = vmax.f32 %v1098, %v1048
    %v1103 = vmax.f32 %v1099, %v1053
    %v1104 = vmax.f32 %v1100, %v1056
    %v1105 = vmax.f32 %v1101, %v1061
    %v1106 = vmax.f32 %v1102, %v1064
    %v1107 = vmax.f32 %v1103, %v1069
    %v1108 = vmax.f32 %v1104, %v1072
    %v1109 = vmax.f32 %v1105, %v1077
    %v1110 = vmax.f32 %v1106, %v1080
    // Predicated region
    $region42: #{tpu_custom_call.1} parent=1 // pred_check
      %p1111 = pneg %p34
    $region43: #{tpu_custom_call.1} parent=1 // pred_check_branch
      %1113 = sbr.rel (%p1111) target = $region45
    $region44: #{tpu_custom_call.1} parent=1 // pred_region
      %1114 = vst [vmem:[#allocation2] sm:$0xff] %v1107
      %1115 = vst [vmem:[#allocation2 + $0x8] sm:$0xff] %v1108
      %1116 = vst [vmem:[#allocation2 + $0x10] sm:$0xff] %v1109
      %1117 = vst [vmem:[#allocation2 + $0x18] sm:$0xff] %v1110
    $region45: #{tpu_custom_call.1} parent=1 // pred_fallthru
      _
    %p1118 = scmp.gt.s32.totalorder 0, 0
    // Predicated region
    $region46: #{tpu_custom_call.1} parent=1 // pred_check
      %p1119 = pneg %p1118
    $region47: #{tpu_custom_call.1} parent=1 // pred_check_branch
      %1121 = sbr.rel (%p1119) target = $region49
    $region48: #{tpu_custom_call.1} parent=1 // pred_region
      %v1122 = vld [vmem:[#allocation2] sm:$0xff]
      %v1123 = vld [vmem:[#allocation2 + $0x8] sm:$0xff]
      %v1124 = vld [vmem:[#allocation2 + $0x10] sm:$0xff]
      %v1125 = vld [vmem:[#allocation2 + $0x18] sm:$0xff]
      %v1126 = vmax.f32 %v1122, %v1107
      %v1127 = vmax.f32 %v1123, %v1108
      %v1128 = vmax.f32 %v1124, %v1109
      %v1129 = vmax.f32 %v1125, %v1110
      %1130 = vst [vmem:[#allocation2] sm:$0xff] %v1126
      %1131 = vst [vmem:[#allocation2 + $0x8] sm:$0xff] %v1127
      %1132 = vst [vmem:[#allocation2 + $0x10] sm:$0xff] %v1128
      %1133 = vst [vmem:[#allocation2 + $0x18] sm:$0xff] %v1129
    $region49: #{tpu_custom_call.1} parent=1 // pred_fallthru
      _
    // Predicated region
    $region50: #{tpu_custom_call.1} parent=1 // pred_check
      %p1134 = pneg %p34
    $region51: #{tpu_custom_call.1} parent=1 // pred_check_branch
      %1136 = sbr.rel (%p1134) target = $region53
    $region52: #{tpu_custom_call.1} parent=1 // pred_region
      %v1137 = vld [vmem:[#allocation2] sm:$0xff]
      %v1138 = vld [vmem:[#allocation2 + $0x8] sm:$0xff]
      %v1139 = vld [vmem:[#allocation2 + $0x10] sm:$0xff]
      %v1140 = vld [vmem:[#allocation2 + $0x18] sm:$0xff]
      %1141 = vst [vmem:[#allocation4] sm:$0xff] %v1137
      %1142 = vst [vmem:[#allocation4 + $0x8] sm:$0xff] %v1138
      %1143 = vst [vmem:[#allocation4 + $0x10] sm:$0xff] %v1139
      %1144 = vst [vmem:[#allocation4 + $0x18] sm:$0xff] %v1140
    $region53: #{tpu_custom_call.1} parent=1 // pred_fallthru
      _
    // Predicated region
    $region54: #{tpu_custom_call.1} parent=1 // pred_check
      _
    $region55: #{tpu_custom_call.1} parent=1 // pred_check_branch
      %1146 = sbr.rel (0) target = $region57
    $region56: #{tpu_custom_call.1} parent=1 // pred_region
      %s1148 = ssub.s32 512, 512
      %1149 = vsyncadd [#allocation5], %s1148
      %s1150 = sshll.u32 [#allocation4], 4
      %s1151 = int_to_ptr.vmem [resolvable:$true] %s1150
      %1156 = dma.vmem_to_hbm [thread:$0]  %s1151, 512, %s9, [#allocation5], 128, 128, 8
    $region57: #{tpu_custom_call.1} parent=1 // pred_fallthru
      _
    // Predicated region
    $region58: #{tpu_custom_call.1} parent=1 // pred_check
      _
    $region59: #{tpu_custom_call.1} parent=1 // pred_check_branch
      %1158 = sbr.rel (0) target = $region61
    $region60: #{tpu_custom_call.1} parent=1 // pred_region
      %1159 = dma.done [#allocation5], 512
    $region61: #{tpu_custom_call.1} parent=1 // pred_fallthru
      _
    %1160 = vsyncpa [#allocation5], 1

</llo_original>
